<compile_context>
chip_gen: v6e
topology: v6e:2x2x1
jax: 0.10.0
libtpu: 0.0.40
codegen_flags: <defaults>
</compile_context>

<pallas_src>
import jax
import jax.numpy as jnp
from jax.experimental import pallas as pl
from jax.experimental.pallas import tpu as pltpu


def _encoder_gru_kernel(ids_ref, emb_ref, wih_ref, whh_ref, bih_ref, bhh_ref,
                        out_ref, hid_ref):
    """Fused embedding lookup + whole-sequence single-layer GRU (h0 = 0)."""
    S, H = out_ref.shape
    V = emb_ref.shape[0]

    # ---- Embedding lookup as a one-hot MXU matmul (exact for f32) ----------
    ids = ids_ref[...]                                                # (S, 1) i32
    vocab = jax.lax.broadcasted_iota(jnp.int32, (S, V), 1)            # (S, V)
    onehot = (vocab == ids).astype(jnp.float32)                       # (S, V)
    x = jnp.dot(onehot, emb_ref[...],
                preferred_element_type=jnp.float32)                   # (S, E)

    # ---- Hoisted input projections, one per gate (lane dim = H) ------------
    # torch.nn.GRU row layout of w_ih / w_hh / biases: [r, z, n].
    def in_proj(g):
        w_t = wih_ref[g * H:(g + 1) * H, :].T                         # (E, H), hoisted transpose
        return jnp.dot(x, w_t, preferred_element_type=jnp.float32) + bih_ref[g:g + 1, :]

    gxr, gxz, gxn = in_proj(0), in_proj(1), in_proj(2)                # each (S, H)

    # Recurrent gate matrices, transposed once outside the unrolled loop.
    whr_t = whh_ref[0 * H:1 * H, :].T                                 # (H, H)
    whz_t = whh_ref[1 * H:2 * H, :].T
    whn_t = whh_ref[2 * H:3 * H, :].T
    bhr, bhz, bhn = bhh_ref[0:1, :], bhh_ref[1:2, :], bhh_ref[2:3, :]

    h = jnp.zeros((1, H), dtype=jnp.float32)                          # h_0 = 0 (PyTorch default)
    outs = []
    # S is small & static -> fully unrolled; all slices are compile-time.
    for t in range(S):
        ghr = jnp.dot(h, whr_t, preferred_element_type=jnp.float32) + bhr
        ghz = jnp.dot(h, whz_t, preferred_element_type=jnp.float32) + bhz
        ghn = jnp.dot(h, whn_t, preferred_element_type=jnp.float32) + bhn
        r = jax.nn.sigmoid(gxr[t:t + 1, :] + ghr)
        z = jax.nn.sigmoid(gxz[t:t + 1, :] + ghz)
        n = jnp.tanh(gxn[t:t + 1, :] + r * ghn)       # b_hn stays inside r*(.) — torch semantics
        h = (1.0 - z) * n + z * h
        outs.append(h)

    # Single full-extent stores; HBM writeback happens once at kernel end.
    out_ref[...] = jnp.concatenate(outs, axis=0)                      # (S, H)
    hid_ref[...] = h                                                  # (1, H) == h_S


def encoder_forward(token_ids, embedding_table, w_ih, w_hh, b_ih, b_hh):
    """Pallas implementation of Encoder.forward: returns (output, hidden).

    Shapes match the PyTorch module for a length-S input:
      output: (S, 1, H), hidden: (n_layers=1, 1, H).
    """
    S = token_ids.shape[0]
    H = w_hh.shape[1]

    ids_2d = token_ids.astype(jnp.int32).reshape(S, 1)

    out2d, hid2d = pl.pallas_call(
        _encoder_gru_kernel,
        out_shape=(jax.ShapeDtypeStruct((S, H), jnp.float32),
                   jax.ShapeDtypeStruct((1, H), jnp.float32)),
        # No grid: everything resident in VMEM for the single invocation.
        in_specs=[pl.BlockSpec(memory_space=pltpu.MemorySpace.VMEM)] * 6,
        out_specs=[pl.BlockSpec(memory_space=pltpu.MemorySpace.VMEM)] * 2,
    )(ids_2d,
      embedding_table.astype(jnp.float32),
      w_ih.astype(jnp.float32),                       # (3H, E)  raw PyTorch layout
      w_hh.astype(jnp.float32),                       # (3H, H)
      b_ih.astype(jnp.float32).reshape(3, H),         # free row-major reshape
      b_hh.astype(jnp.float32).reshape(3, H))

    output = out2d.reshape(S, 1, H)
    hidden = hid2d.reshape(1, 1, H)
    return output, hidden


def gru_ref(token_ids, emb, w_ih, w_hh, b_ih, b_hh):
    """Pure-JAX reference matching torch.nn.GRU (n_layers=1, h0=0)."""
    H = w_hh.shape[1]
    x_seq = emb[token_ids]                                     # (S, E)

    def step(h, x):
        gx = x @ w_ih.T + b_ih
        gh = h @ w_hh.T + b_hh
        r = jax.nn.sigmoid(gx[0:H] + gh[0:H])
        z = jax.nn.sigmoid(gx[H:2 * H] + gh[H:2 * H])
        n = jnp.tanh(gx[2 * H:] + r * gh[2 * H:])
        h_new = (1.0 - z) * n + z * h
        return h_new, h_new

    h0 = jnp.zeros((H,), jnp.float32)
    hN, ys = jax.lax.scan(step, h0, x_seq)
    return ys.reshape(-1, 1, H), hN.reshape(1, 1, H)


if __name__ == "__main__":
    V, E, H, S = 50, 32, 32, 8                    # vocab, embedding_size, hidden_size, seq_len
    key = jax.random.PRNGKey(0)
    k_emb, k_wih, k_whh, k_bih, k_bhh, k_ids = jax.random.split(key, 6)

    bound = float(1.0 / (H ** 0.5))               # PyTorch-style uniform init range
    emb = jax.random.normal(k_emb, (V, E), jnp.float32)
    w_ih = jax.random.uniform(k_wih, (3 * H, E), jnp.float32, -bound, bound)
    w_hh = jax.random.uniform(k_whh, (3 * H, H), jnp.float32, -bound, bound)
    b_ih = jax.random.uniform(k_bih, (3 * H,), jnp.float32, -bound, bound)
    b_hh = jax.random.uniform(k_bhh, (3 * H,), jnp.float32, -bound, bound)
    token_ids = jax.random.randint(k_ids, (S,), 0, V, dtype=jnp.int32)

    out, hid = encoder_forward(token_ids, emb, w_ih, w_hh, b_ih, b_hh)
    jax.block_until_ready((out, hid))

    out_ref, hid_ref = gru_ref(token_ids, emb, w_ih, w_hh, b_ih, b_hh)
    assert out.shape == (S, 1, H) and hid.shape == (1, 1, H)
    assert jnp.allclose(out, out_ref, atol=1e-5, rtol=1e-5)
    assert jnp.allclose(hid, hid_ref, atol=1e-5, rtol=1e-5)
    print("KERNEL_OK")
</pallas_src>

<mosaic_0001>
module attributes {stable_mosaic.version = 11 : i64} {
  func.func @_encoder_gru_kernel(%arg0: memref<8x1xi32, #tpu.memory_space<vmem>>, %arg1: memref<50x32xf32, #tpu.memory_space<vmem>>, %arg2: memref<96x32xf32, #tpu.memory_space<vmem>>, %arg3: memref<96x32xf32, #tpu.memory_space<vmem>>, %arg4: memref<3x32xf32, #tpu.memory_space<vmem>>, %arg5: memref<3x32xf32, #tpu.memory_space<vmem>>, %arg6: memref<8x32xf32, #tpu.memory_space<vmem>>, %arg7: memref<1x32xf32, #tpu.memory_space<vmem>>) attributes {dimension_semantics = [], scalar_prefetch = 0 : i64, scratch_operands = 0 : i64, tpu.core_type = #tpu.core_type<tc>} {
    %c0 = arith.constant 0 : index
    %c0_0 = arith.constant 0 : index
    %0 = vector.load %arg0[%c0, %c0_0] : memref<8x1xi32, #tpu.memory_space<vmem>>, vector<8x1xi32>
    %1 = tpu.iota {dimensions = array<i32: 1>} : vector<8x50xi32>
    %2 = vector.broadcast %0 : vector<8x1xi32> to vector<8x50xi32>
    %3 = arith.cmpi eq, %1, %2 : vector<8x50xi32>
    %4 = arith.extui %3 : vector<8x50xi1> to vector<8x50xi32>
    %5 = arith.sitofp %4 : vector<8x50xi32> to vector<8x50xf32>
    %c0_1 = arith.constant 0 : index
    %c0_2 = arith.constant 0 : index
    %6 = vector.load %arg1[%c0_1, %c0_2] : memref<50x32xf32, #tpu.memory_space<vmem>>, vector<50x32xf32>
    %cst = arith.constant dense<0.000000e+00> : vector<8x32xf32>
    %7 = tpu.matmul %5, %6, %cst {dimension_numbers = #tpu.dot_dimension_numbers<[1], [0], [0], [1], [0, 0, 1, 1], [], []>} : vector<8x50xf32>, vector<50x32xf32>, vector<8x32xf32> -> vector<8x32xf32>
    %c0_3 = arith.constant 0 : index
    %c0_4 = arith.constant 0 : index
    %8 = vector.load %arg2[%c0_3, %c0_4] : memref<96x32xf32, #tpu.memory_space<vmem>>, vector<32x32xf32>
    %9 = tpu.transpose %8, [1, 0] : vector<32x32xf32> -> vector<32x32xf32>
    %cst_5 = arith.constant dense<0.000000e+00> : vector<8x32xf32>
    %10 = tpu.matmul %7, %9, %cst_5 {dimension_numbers = #tpu.dot_dimension_numbers<[1], [0], [0], [1], [0, 0, 1, 1], [], []>} : vector<8x32xf32>, vector<32x32xf32>, vector<8x32xf32> -> vector<8x32xf32>
    %c0_6 = arith.constant 0 : index
    %c0_7 = arith.constant 0 : index
    %11 = vector.load %arg4[%c0_6, %c0_7] : memref<3x32xf32, #tpu.memory_space<vmem>>, vector<1x32xf32>
    %12 = vector.broadcast %11 : vector<1x32xf32> to vector<8x32xf32>
    %13 = arith.addf %10, %12 : vector<8x32xf32>
    %c32 = arith.constant 32 : index
    %c0_8 = arith.constant 0 : index
    %14 = vector.load %arg2[%c32, %c0_8] : memref<96x32xf32, #tpu.memory_space<vmem>>, vector<32x32xf32>
    %15 = tpu.transpose %14, [1, 0] : vector<32x32xf32> -> vector<32x32xf32>
    %cst_9 = arith.constant dense<0.000000e+00> : vector<8x32xf32>
    %16 = tpu.matmul %7, %15, %cst_9 {dimension_numbers = #tpu.dot_dimension_numbers<[1], [0], [0], [1], [0, 0, 1, 1], [], []>} : vector<8x32xf32>, vector<32x32xf32>, vector<8x32xf32> -> vector<8x32xf32>
    %c1 = arith.constant 1 : index
    %c0_10 = arith.constant 0 : index
    %17 = vector.load %arg4[%c1, %c0_10] : memref<3x32xf32, #tpu.memory_space<vmem>>, vector<1x32xf32>
    %18 = vector.broadcast %17 : vector<1x32xf32> to vector<8x32xf32>
    %19 = arith.addf %16, %18 : vector<8x32xf32>
    %c64 = arith.constant 64 : index
    %c0_11 = arith.constant 0 : index
    %20 = vector.load %arg2[%c64, %c0_11] : memref<96x32xf32, #tpu.memory_space<vmem>>, vector<32x32xf32>
    %21 = tpu.transpose %20, [1, 0] : vector<32x32xf32> -> vector<32x32xf32>
    %cst_12 = arith.constant dense<0.000000e+00> : vector<8x32xf32>
    %22 = tpu.matmul %7, %21, %cst_12 {dimension_numbers = #tpu.dot_dimension_numbers<[1], [0], [0], [1], [0, 0, 1, 1], [], []>} : vector<8x32xf32>, vector<32x32xf32>, vector<8x32xf32> -> vector<8x32xf32>
    %c2 = arith.constant 2 : index
    %c0_13 = arith.constant 0 : index
    %23 = vector.load %arg4[%c2, %c0_13] : memref<3x32xf32, #tpu.memory_space<vmem>>, vector<1x32xf32>
    %24 = vector.broadcast %23 : vector<1x32xf32> to vector<8x32xf32>
    %25 = arith.addf %22, %24 : vector<8x32xf32>
    %c0_14 = arith.constant 0 : index
    %c0_15 = arith.constant 0 : index
    %26 = vector.load %arg3[%c0_14, %c0_15] : memref<96x32xf32, #tpu.memory_space<vmem>>, vector<32x32xf32>
    %27 = tpu.transpose %26, [1, 0] : vector<32x32xf32> -> vector<32x32xf32>
    %c32_16 = arith.constant 32 : index
    %c0_17 = arith.constant 0 : index
    %28 = vector.load %arg3[%c32_16, %c0_17] : memref<96x32xf32, #tpu.memory_space<vmem>>, vector<32x32xf32>
    %29 = tpu.transpose %28, [1, 0] : vector<32x32xf32> -> vector<32x32xf32>
    %c64_18 = arith.constant 64 : index
    %c0_19 = arith.constant 0 : index
    %30 = vector.load %arg3[%c64_18, %c0_19] : memref<96x32xf32, #tpu.memory_space<vmem>>, vector<32x32xf32>
    %31 = tpu.transpose %30, [1, 0] : vector<32x32xf32> -> vector<32x32xf32>
    %c0_20 = arith.constant 0 : index
    %c0_21 = arith.constant 0 : index
    %32 = vector.load %arg5[%c0_20, %c0_21] : memref<3x32xf32, #tpu.memory_space<vmem>>, vector<1x32xf32>
    %c1_22 = arith.constant 1 : index
    %c0_23 = arith.constant 0 : index
    %33 = vector.load %arg5[%c1_22, %c0_23] : memref<3x32xf32, #tpu.memory_space<vmem>>, vector<1x32xf32>
    %c2_24 = arith.constant 2 : index
    %c0_25 = arith.constant 0 : index
    %34 = vector.load %arg5[%c2_24, %c0_25] : memref<3x32xf32, #tpu.memory_space<vmem>>, vector<1x32xf32>
    %cst_26 = arith.constant 0.000000e+00 : f32
    %35 = vector.broadcast %cst_26 : f32 to vector<1x32xf32>
    %cst_27 = arith.constant dense<0.000000e+00> : vector<1x32xf32>
    %36 = tpu.matmul %35, %27, %cst_27 {dimension_numbers = #tpu.dot_dimension_numbers<[1], [0], [0], [1], [0, 0, 1, 1], [], []>} : vector<1x32xf32>, vector<32x32xf32>, vector<1x32xf32> -> vector<1x32xf32>
    %37 = arith.addf %36, %32 : vector<1x32xf32>
    %cst_28 = arith.constant dense<0.000000e+00> : vector<1x32xf32>
    %38 = tpu.matmul %35, %29, %cst_28 {dimension_numbers = #tpu.dot_dimension_numbers<[1], [0], [0], [1], [0, 0, 1, 1], [], []>} : vector<1x32xf32>, vector<32x32xf32>, vector<1x32xf32> -> vector<1x32xf32>
    %39 = arith.addf %38, %33 : vector<1x32xf32>
    %cst_29 = arith.constant dense<0.000000e+00> : vector<1x32xf32>
    %40 = tpu.matmul %35, %31, %cst_29 {dimension_numbers = #tpu.dot_dimension_numbers<[1], [0], [0], [1], [0, 0, 1, 1], [], []>} : vector<1x32xf32>, vector<32x32xf32>, vector<1x32xf32> -> vector<1x32xf32>
    %41 = arith.addf %40, %34 : vector<1x32xf32>
    %42 = vector.extract_strided_slice %13 {offsets = [0, 0], sizes = [1, 32], strides = [1, 1]} : vector<8x32xf32> to vector<1x32xf32>
    %43 = arith.addf %42, %37 : vector<1x32xf32>
    %44 = arith.negf %43 : vector<1x32xf32>
    %45 = math.exp %44 : vector<1x32xf32>
    %cst_30 = arith.constant 1.000000e+00 : f32
    %46 = vector.broadcast %cst_30 : f32 to vector<1x32xf32>
    %47 = arith.addf %46, %45 : vector<1x32xf32>
    %48 = arith.divf %46, %47 : vector<1x32xf32>
    %49 = vector.extract_strided_slice %19 {offsets = [0, 0], sizes = [1, 32], strides = [1, 1]} : vector<8x32xf32> to vector<1x32xf32>
    %50 = arith.addf %49, %39 : vector<1x32xf32>
    %51 = arith.negf %50 : vector<1x32xf32>
    %52 = math.exp %51 : vector<1x32xf32>
    %cst_31 = arith.constant 1.000000e+00 : f32
    %53 = vector.broadcast %cst_31 : f32 to vector<1x32xf32>
    %54 = arith.addf %53, %52 : vector<1x32xf32>
    %55 = arith.divf %53, %54 : vector<1x32xf32>
    %56 = vector.extract_strided_slice %25 {offsets = [0, 0], sizes = [1, 32], strides = [1, 1]} : vector<8x32xf32> to vector<1x32xf32>
    %57 = arith.mulf %48, %41 : vector<1x32xf32>
    %58 = arith.addf %56, %57 : vector<1x32xf32>
    %59 = math.tanh %58 : vector<1x32xf32>
    %cst_32 = arith.constant 1.000000e+00 : f32
    %60 = vector.broadcast %cst_32 : f32 to vector<1x32xf32>
    %61 = arith.subf %60, %55 : vector<1x32xf32>
    %62 = arith.mulf %61, %59 : vector<1x32xf32>
    %63 = arith.mulf %55, %35 : vector<1x32xf32>
    %64 = arith.addf %62, %63 : vector<1x32xf32>
    %cst_33 = arith.constant dense<0.000000e+00> : vector<1x32xf32>
    %65 = tpu.matmul %64, %27, %cst_33 {dimension_numbers = #tpu.dot_dimension_numbers<[1], [0], [0], [1], [0, 0, 1, 1], [], []>} : vector<1x32xf32>, vector<32x32xf32>, vector<1x32xf32> -> vector<1x32xf32>
    %66 = arith.addf %65, %32 : vector<1x32xf32>
    %cst_34 = arith.constant dense<0.000000e+00> : vector<1x32xf32>
    %67 = tpu.matmul %64, %29, %cst_34 {dimension_numbers = #tpu.dot_dimension_numbers<[1], [0], [0], [1], [0, 0, 1, 1], [], []>} : vector<1x32xf32>, vector<32x32xf32>, vector<1x32xf32> -> vector<1x32xf32>
    %68 = arith.addf %67, %33 : vector<1x32xf32>
    %cst_35 = arith.constant dense<0.000000e+00> : vector<1x32xf32>
    %69 = tpu.matmul %64, %31, %cst_35 {dimension_numbers = #tpu.dot_dimension_numbers<[1], [0], [0], [1], [0, 0, 1, 1], [], []>} : vector<1x32xf32>, vector<32x32xf32>, vector<1x32xf32> -> vector<1x32xf32>
    %70 = arith.addf %69, %34 : vector<1x32xf32>
    %71 = vector.extract_strided_slice %13 {offsets = [1, 0], sizes = [1, 32], strides = [1, 1]} : vector<8x32xf32> to vector<1x32xf32>
    %72 = arith.addf %71, %66 : vector<1x32xf32>
    %73 = arith.negf %72 : vector<1x32xf32>
    %74 = math.exp %73 : vector<1x32xf32>
    %cst_36 = arith.constant 1.000000e+00 : f32
    %75 = vector.broadcast %cst_36 : f32 to vector<1x32xf32>
    %76 = arith.addf %75, %74 : vector<1x32xf32>
    %77 = arith.divf %75, %76 : vector<1x32xf32>
    %78 = vector.extract_strided_slice %19 {offsets = [1, 0], sizes = [1, 32], strides = [1, 1]} : vector<8x32xf32> to vector<1x32xf32>
    %79 = arith.addf %78, %68 : vector<1x32xf32>
    %80 = arith.negf %79 : vector<1x32xf32>
    %81 = math.exp %80 : vector<1x32xf32>
    %cst_37 = arith.constant 1.000000e+00 : f32
    %82 = vector.broadcast %cst_37 : f32 to vector<1x32xf32>
    %83 = arith.addf %82, %81 : vector<1x32xf32>
    %84 = arith.divf %82, %83 : vector<1x32xf32>
    %85 = vector.extract_strided_slice %25 {offsets = [1, 0], sizes = [1, 32], strides = [1, 1]} : vector<8x32xf32> to vector<1x32xf32>
    %86 = arith.mulf %77, %70 : vector<1x32xf32>
    %87 = arith.addf %85, %86 : vector<1x32xf32>
    %88 = math.tanh %87 : vector<1x32xf32>
    %cst_38 = arith.constant 1.000000e+00 : f32
    %89 = vector.broadcast %cst_38 : f32 to vector<1x32xf32>
    %90 = arith.subf %89, %84 : vector<1x32xf32>
    %91 = arith.mulf %90, %88 : vector<1x32xf32>
    %92 = arith.mulf %84, %64 : vector<1x32xf32>
    %93 = arith.addf %91, %92 : vector<1x32xf32>
    %cst_39 = arith.constant dense<0.000000e+00> : vector<1x32xf32>
    %94 = tpu.matmul %93, %27, %cst_39 {dimension_numbers = #tpu.dot_dimension_numbers<[1], [0], [0], [1], [0, 0, 1, 1], [], []>} : vector<1x32xf32>, vector<32x32xf32>, vector<1x32xf32> -> vector<1x32xf32>
    %95 = arith.addf %94, %32 : vector<1x32xf32>
    %cst_40 = arith.constant dense<0.000000e+00> : vector<1x32xf32>
    %96 = tpu.matmul %93, %29, %cst_40 {dimension_numbers = #tpu.dot_dimension_numbers<[1], [0], [0], [1], [0, 0, 1, 1], [], []>} : vector<1x32xf32>, vector<32x32xf32>, vector<1x32xf32> -> vector<1x32xf32>
    %97 = arith.addf %96, %33 : vector<1x32xf32>
    %cst_41 = arith.constant dense<0.000000e+00> : vector<1x32xf32>
    %98 = tpu.matmul %93, %31, %cst_41 {dimension_numbers = #tpu.dot_dimension_numbers<[1], [0], [0], [1], [0, 0, 1, 1], [], []>} : vector<1x32xf32>, vector<32x32xf32>, vector<1x32xf32> -> vector<1x32xf32>
    %99 = arith.addf %98, %34 : vector<1x32xf32>
    %100 = vector.extract_strided_slice %13 {offsets = [2, 0], sizes = [1, 32], strides = [1, 1]} : vector<8x32xf32> to vector<1x32xf32>
    %101 = arith.addf %100, %95 : vector<1x32xf32>
    %102 = arith.negf %101 : vector<1x32xf32>
    %103 = math.exp %102 : vector<1x32xf32>
    %cst_42 = arith.constant 1.000000e+00 : f32
    %104 = vector.broadcast %cst_42 : f32 to vector<1x32xf32>
    %105 = arith.addf %104, %103 : vector<1x32xf32>
    %106 = arith.divf %104, %105 : vector<1x32xf32>
    %107 = vector.extract_strided_slice %19 {offsets = [2, 0], sizes = [1, 32], strides = [1, 1]} : vector<8x32xf32> to vector<1x32xf32>
    %108 = arith.addf %107, %97 : vector<1x32xf32>
    %109 = arith.negf %108 : vector<1x32xf32>
    %110 = math.exp %109 : vector<1x32xf32>
    %cst_43 = arith.constant 1.000000e+00 : f32
    %111 = vector.broadcast %cst_43 : f32 to vector<1x32xf32>
    %112 = arith.addf %111, %110 : vector<1x32xf32>
    %113 = arith.divf %111, %112 : vector<1x32xf32>
    %114 = vector.extract_strided_slice %25 {offsets = [2, 0], sizes = [1, 32], strides = [1, 1]} : vector<8x32xf32> to vector<1x32xf32>
    %115 = arith.mulf %106, %99 : vector<1x32xf32>
    %116 = arith.addf %114, %115 : vector<1x32xf32>
    %117 = math.tanh %116 : vector<1x32xf32>
    %cst_44 = arith.constant 1.000000e+00 : f32
    %118 = vector.broadcast %cst_44 : f32 to vector<1x32xf32>
    %119 = arith.subf %118, %113 : vector<1x32xf32>
    %120 = arith.mulf %119, %117 : vector<1x32xf32>
    %121 = arith.mulf %113, %93 : vector<1x32xf32>
    %122 = arith.addf %120, %121 : vector<1x32xf32>
    %cst_45 = arith.constant dense<0.000000e+00> : vector<1x32xf32>
    %123 = tpu.matmul %122, %27, %cst_45 {dimension_numbers = #tpu.dot_dimension_numbers<[1], [0], [0], [1], [0, 0, 1, 1], [], []>} : vector<1x32xf32>, vector<32x32xf32>, vector<1x32xf32> -> vector<1x32xf32>
    %124 = arith.addf %123, %32 : vector<1x32xf32>
    %cst_46 = arith.constant dense<0.000000e+00> : vector<1x32xf32>
    %125 = tpu.matmul %122, %29, %cst_46 {dimension_numbers = #tpu.dot_dimension_numbers<[1], [0], [0], [1], [0, 0, 1, 1], [], []>} : vector<1x32xf32>, vector<32x32xf32>, vector<1x32xf32> -> vector<1x32xf32>
    %126 = arith.addf %125, %33 : vector<1x32xf32>
    %cst_47 = arith.constant dense<0.000000e+00> : vector<1x32xf32>
    %127 = tpu.matmul %122, %31, %cst_47 {dimension_numbers = #tpu.dot_dimension_numbers<[1], [0], [0], [1], [0, 0, 1, 1], [], []>} : vector<1x32xf32>, vector<32x32xf32>, vector<1x32xf32> -> vector<1x32xf32>
    %128 = arith.addf %127, %34 : vector<1x32xf32>
    %129 = vector.extract_strided_slice %13 {offsets = [3, 0], sizes = [1, 32], strides = [1, 1]} : vector<8x32xf32> to vector<1x32xf32>
    %130 = arith.addf %129, %124 : vector<1x32xf32>
    %131 = arith.negf %130 : vector<1x32xf32>
    %132 = math.exp %131 : vector<1x32xf32>
    %cst_48 = arith.constant 1.000000e+00 : f32
    %133 = vector.broadcast %cst_48 : f32 to vector<1x32xf32>
    %134 = arith.addf %133, %132 : vector<1x32xf32>
    %135 = arith.divf %133, %134 : vector<1x32xf32>
    %136 = vector.extract_strided_slice %19 {offsets = [3, 0], sizes = [1, 32], strides = [1, 1]} : vector<8x32xf32> to vector<1x32xf32>
    %137 = arith.addf %136, %126 : vector<1x32xf32>
    %138 = arith.negf %137 : vector<1x32xf32>
    %139 = math.exp %138 : vector<1x32xf32>
    %cst_49 = arith.constant 1.000000e+00 : f32
    %140 = vector.broadcast %cst_49 : f32 to vector<1x32xf32>
    %141 = arith.addf %140, %139 : vector<1x32xf32>
    %142 = arith.divf %140, %141 : vector<1x32xf32>
    %143 = vector.extract_strided_slice %25 {offsets = [3, 0], sizes = [1, 32], strides = [1, 1]} : vector<8x32xf32> to vector<1x32xf32>
    %144 = arith.mulf %135, %128 : vector<1x32xf32>
    %145 = arith.addf %143, %144 : vector<1x32xf32>
    %146 = math.tanh %145 : vector<1x32xf32>
    %cst_50 = arith.constant 1.000000e+00 : f32
    %147 = vector.broadcast %cst_50 : f32 to vector<1x32xf32>
    %148 = arith.subf %147, %142 : vector<1x32xf32>
    %149 = arith.mulf %148, %146 : vector<1x32xf32>
    %150 = arith.mulf %142, %122 : vector<1x32xf32>
    %151 = arith.addf %149, %150 : vector<1x32xf32>
    %cst_51 = arith.constant dense<0.000000e+00> : vector<1x32xf32>
    %152 = tpu.matmul %151, %27, %cst_51 {dimension_numbers = #tpu.dot_dimension_numbers<[1], [0], [0], [1], [0, 0, 1, 1], [], []>} : vector<1x32xf32>, vector<32x32xf32>, vector<1x32xf32> -> vector<1x32xf32>
    %153 = arith.addf %152, %32 : vector<1x32xf32>
    %cst_52 = arith.constant dense<0.000000e+00> : vector<1x32xf32>
    %154 = tpu.matmul %151, %29, %cst_52 {dimension_numbers = #tpu.dot_dimension_numbers<[1], [0], [0], [1], [0, 0, 1, 1], [], []>} : vector<1x32xf32>, vector<32x32xf32>, vector<1x32xf32> -> vector<1x32xf32>
    %155 = arith.addf %154, %33 : vector<1x32xf32>
    %cst_53 = arith.constant dense<0.000000e+00> : vector<1x32xf32>
    %156 = tpu.matmul %151, %31, %cst_53 {dimension_numbers = #tpu.dot_dimension_numbers<[1], [0], [0], [1], [0, 0, 1, 1], [], []>} : vector<1x32xf32>, vector<32x32xf32>, vector<1x32xf32> -> vector<1x32xf32>
    %157 = arith.addf %156, %34 : vector<1x32xf32>
    %158 = vector.extract_strided_slice %13 {offsets = [4, 0], sizes = [1, 32], strides = [1, 1]} : vector<8x32xf32> to vector<1x32xf32>
    %159 = arith.addf %158, %153 : vector<1x32xf32>
    %160 = arith.negf %159 : vector<1x32xf32>
    %161 = math.exp %160 : vector<1x32xf32>
    %cst_54 = arith.constant 1.000000e+00 : f32
    %162 = vector.broadcast %cst_54 : f32 to vector<1x32xf32>
    %163 = arith.addf %162, %161 : vector<1x32xf32>
    %164 = arith.divf %162, %163 : vector<1x32xf32>
    %165 = vector.extract_strided_slice %19 {offsets = [4, 0], sizes = [1, 32], strides = [1, 1]} : vector<8x32xf32> to vector<1x32xf32>
    %166 = arith.addf %165, %155 : vector<1x32xf32>
    %167 = arith.negf %166 : vector<1x32xf32>
    %168 = math.exp %167 : vector<1x32xf32>
    %cst_55 = arith.constant 1.000000e+00 : f32
    %169 = vector.broadcast %cst_55 : f32 to vector<1x32xf32>
    %170 = arith.addf %169, %168 : vector<1x32xf32>
    %171 = arith.divf %169, %170 : vector<1x32xf32>
    %172 = vector.extract_strided_slice %25 {offsets = [4, 0], sizes = [1, 32], strides = [1, 1]} : vector<8x32xf32> to vector<1x32xf32>
    %173 = arith.mulf %164, %157 : vector<1x32xf32>
    %174 = arith.addf %172, %173 : vector<1x32xf32>
    %175 = math.tanh %174 : vector<1x32xf32>
    %cst_56 = arith.constant 1.000000e+00 : f32
    %176 = vector.broadcast %cst_56 : f32 to vector<1x32xf32>
    %177 = arith.subf %176, %171 : vector<1x32xf32>
    %178 = arith.mulf %177, %175 : vector<1x32xf32>
    %179 = arith.mulf %171, %151 : vector<1x32xf32>
    %180 = arith.addf %178, %179 : vector<1x32xf32>
    %cst_57 = arith.constant dense<0.000000e+00> : vector<1x32xf32>
    %181 = tpu.matmul %180, %27, %cst_57 {dimension_numbers = #tpu.dot_dimension_numbers<[1], [0], [0], [1], [0, 0, 1, 1], [], []>} : vector<1x32xf32>, vector<32x32xf32>, vector<1x32xf32> -> vector<1x32xf32>
    %182 = arith.addf %181, %32 : vector<1x32xf32>
    %cst_58 = arith.constant dense<0.000000e+00> : vector<1x32xf32>
    %183 = tpu.matmul %180, %29, %cst_58 {dimension_numbers = #tpu.dot_dimension_numbers<[1], [0], [0], [1], [0, 0, 1, 1], [], []>} : vector<1x32xf32>, vector<32x32xf32>, vector<1x32xf32> -> vector<1x32xf32>
    %184 = arith.addf %183, %33 : vector<1x32xf32>
    %cst_59 = arith.constant dense<0.000000e+00> : vector<1x32xf32>
    %185 = tpu.matmul %180, %31, %cst_59 {dimension_numbers = #tpu.dot_dimension_numbers<[1], [0], [0], [1], [0, 0, 1, 1], [], []>} : vector<1x32xf32>, vector<32x32xf32>, vector<1x32xf32> -> vector<1x32xf32>
    %186 = arith.addf %185, %34 : vector<1x32xf32>
    %187 = vector.extract_strided_slice %13 {offsets = [5, 0], sizes = [1, 32], strides = [1, 1]} : vector<8x32xf32> to vector<1x32xf32>
    %188 = arith.addf %187, %182 : vector<1x32xf32>
    %189 = arith.negf %188 : vector<1x32xf32>
    %190 = math.exp %189 : vector<1x32xf32>
    %cst_60 = arith.constant 1.000000e+00 : f32
    %191 = vector.broadcast %cst_60 : f32 to vector<1x32xf32>
    %192 = arith.addf %191, %190 : vector<1x32xf32>
    %193 = arith.divf %191, %192 : vector<1x32xf32>
    %194 = vector.extract_strided_slice %19 {offsets = [5, 0], sizes = [1, 32], strides = [1, 1]} : vector<8x32xf32> to vector<1x32xf32>
    %195 = arith.addf %194, %184 : vector<1x32xf32>
    %196 = arith.negf %195 : vector<1x32xf32>
    %197 = math.exp %196 : vector<1x32xf32>
    %cst_61 = arith.constant 1.000000e+00 : f32
    %198 = vector.broadcast %cst_61 : f32 to vector<1x32xf32>
    %199 = arith.addf %198, %197 : vector<1x32xf32>
    %200 = arith.divf %198, %199 : vector<1x32xf32>
    %201 = vector.extract_strided_slice %25 {offsets = [5, 0], sizes = [1, 32], strides = [1, 1]} : vector<8x32xf32> to vector<1x32xf32>
    %202 = arith.mulf %193, %186 : vector<1x32xf32>
    %203 = arith.addf %201, %202 : vector<1x32xf32>
    %204 = math.tanh %203 : vector<1x32xf32>
    %cst_62 = arith.constant 1.000000e+00 : f32
    %205 = vector.broadcast %cst_62 : f32 to vector<1x32xf32>
    %206 = arith.subf %205, %200 : vector<1x32xf32>
    %207 = arith.mulf %206, %204 : vector<1x32xf32>
    %208 = arith.mulf %200, %180 : vector<1x32xf32>
    %209 = arith.addf %207, %208 : vector<1x32xf32>
    %cst_63 = arith.constant dense<0.000000e+00> : vector<1x32xf32>
    %210 = tpu.matmul %209, %27, %cst_63 {dimension_numbers = #tpu.dot_dimension_numbers<[1], [0], [0], [1], [0, 0, 1, 1], [], []>} : vector<1x32xf32>, vector<32x32xf32>, vector<1x32xf32> -> vector<1x32xf32>
    %211 = arith.addf %210, %32 : vector<1x32xf32>
    %cst_64 = arith.constant dense<0.000000e+00> : vector<1x32xf32>
    %212 = tpu.matmul %209, %29, %cst_64 {dimension_numbers = #tpu.dot_dimension_numbers<[1], [0], [0], [1], [0, 0, 1, 1], [], []>} : vector<1x32xf32>, vector<32x32xf32>, vector<1x32xf32> -> vector<1x32xf32>
    %213 = arith.addf %212, %33 : vector<1x32xf32>
    %cst_65 = arith.constant dense<0.000000e+00> : vector<1x32xf32>
    %214 = tpu.matmul %209, %31, %cst_65 {dimension_numbers = #tpu.dot_dimension_numbers<[1], [0], [0], [1], [0, 0, 1, 1], [], []>} : vector<1x32xf32>, vector<32x32xf32>, vector<1x32xf32> -> vector<1x32xf32>
    %215 = arith.addf %214, %34 : vector<1x32xf32>
    %216 = vector.extract_strided_slice %13 {offsets = [6, 0], sizes = [1, 32], strides = [1, 1]} : vector<8x32xf32> to vector<1x32xf32>
    %217 = arith.addf %216, %211 : vector<1x32xf32>
    %218 = arith.negf %217 : vector<1x32xf32>
    %219 = math.exp %218 : vector<1x32xf32>
    %cst_66 = arith.constant 1.000000e+00 : f32
    %220 = vector.broadcast %cst_66 : f32 to vector<1x32xf32>
    %221 = arith.addf %220, %219 : vector<1x32xf32>
    %222 = arith.divf %220, %221 : vector<1x32xf32>
    %223 = vector.extract_strided_slice %19 {offsets = [6, 0], sizes = [1, 32], strides = [1, 1]} : vector<8x32xf32> to vector<1x32xf32>
    %224 = arith.addf %223, %213 : vector<1x32xf32>
    %225 = arith.negf %224 : vector<1x32xf32>
    %226 = math.exp %225 : vector<1x32xf32>
    %cst_67 = arith.constant 1.000000e+00 : f32
    %227 = vector.broadcast %cst_67 : f32 to vector<1x32xf32>
    %228 = arith.addf %227, %226 : vector<1x32xf32>
    %229 = arith.divf %227, %228 : vector<1x32xf32>
    %230 = vector.extract_strided_slice %25 {offsets = [6, 0], sizes = [1, 32], strides = [1, 1]} : vector<8x32xf32> to vector<1x32xf32>
    %231 = arith.mulf %222, %215 : vector<1x32xf32>
    %232 = arith.addf %230, %231 : vector<1x32xf32>
    %233 = math.tanh %232 : vector<1x32xf32>
    %cst_68 = arith.constant 1.000000e+00 : f32
    %234 = vector.broadcast %cst_68 : f32 to vector<1x32xf32>
    %235 = arith.subf %234, %229 : vector<1x32xf32>
    %236 = arith.mulf %235, %233 : vector<1x32xf32>
    %237 = arith.mulf %229, %209 : vector<1x32xf32>
    %238 = arith.addf %236, %237 : vector<1x32xf32>
    %cst_69 = arith.constant dense<0.000000e+00> : vector<1x32xf32>
    %239 = tpu.matmul %238, %27, %cst_69 {dimension_numbers = #tpu.dot_dimension_numbers<[1], [0], [0], [1], [0, 0, 1, 1], [], []>} : vector<1x32xf32>, vector<32x32xf32>, vector<1x32xf32> -> vector<1x32xf32>
    %240 = arith.addf %239, %32 : vector<1x32xf32>
    %cst_70 = arith.constant dense<0.000000e+00> : vector<1x32xf32>
    %241 = tpu.matmul %238, %29, %cst_70 {dimension_numbers = #tpu.dot_dimension_numbers<[1], [0], [0], [1], [0, 0, 1, 1], [], []>} : vector<1x32xf32>, vector<32x32xf32>, vector<1x32xf32> -> vector<1x32xf32>
    %242 = arith.addf %241, %33 : vector<1x32xf32>
    %cst_71 = arith.constant dense<0.000000e+00> : vector<1x32xf32>
    %243 = tpu.matmul %238, %31, %cst_71 {dimension_numbers = #tpu.dot_dimension_numbers<[1], [0], [0], [1], [0, 0, 1, 1], [], []>} : vector<1x32xf32>, vector<32x32xf32>, vector<1x32xf32> -> vector<1x32xf32>
    %244 = arith.addf %243, %34 : vector<1x32xf32>
    %245 = vector.extract_strided_slice %13 {offsets = [7, 0], sizes = [1, 32], strides = [1, 1]} : vector<8x32xf32> to vector<1x32xf32>
    %246 = arith.addf %245, %240 : vector<1x32xf32>
    %247 = arith.negf %246 : vector<1x32xf32>
    %248 = math.exp %247 : vector<1x32xf32>
    %cst_72 = arith.constant 1.000000e+00 : f32
    %249 = vector.broadcast %cst_72 : f32 to vector<1x32xf32>
    %250 = arith.addf %249, %248 : vector<1x32xf32>
    %251 = arith.divf %249, %250 : vector<1x32xf32>
    %252 = vector.extract_strided_slice %19 {offsets = [7, 0], sizes = [1, 32], strides = [1, 1]} : vector<8x32xf32> to vector<1x32xf32>
    %253 = arith.addf %252, %242 : vector<1x32xf32>
    %254 = arith.negf %253 : vector<1x32xf32>
    %255 = math.exp %254 : vector<1x32xf32>
    %cst_73 = arith.constant 1.000000e+00 : f32
    %256 = vector.broadcast %cst_73 : f32 to vector<1x32xf32>
    %257 = arith.addf %256, %255 : vector<1x32xf32>
    %258 = arith.divf %256, %257 : vector<1x32xf32>
    %259 = vector.extract_strided_slice %25 {offsets = [7, 0], sizes = [1, 32], strides = [1, 1]} : vector<8x32xf32> to vector<1x32xf32>
    %260 = arith.mulf %251, %244 : vector<1x32xf32>
    %261 = arith.addf %259, %260 : vector<1x32xf32>
    %262 = math.tanh %261 : vector<1x32xf32>
    %cst_74 = arith.constant 1.000000e+00 : f32
    %263 = vector.broadcast %cst_74 : f32 to vector<1x32xf32>
    %264 = arith.subf %263, %258 : vector<1x32xf32>
    %265 = arith.mulf %264, %262 : vector<1x32xf32>
    %266 = arith.mulf %258, %238 : vector<1x32xf32>
    %267 = arith.addf %265, %266 : vector<1x32xf32>
    %268 = tpu.concatenate %64, %93, %122, %151, %180, %209, %238, %267 in 0 : vector<1x32xf32>, vector<1x32xf32>, vector<1x32xf32>, vector<1x32xf32>, vector<1x32xf32>, vector<1x32xf32>, vector<1x32xf32>, vector<1x32xf32> -> vector<8x32xf32>
    %c0_75 = arith.constant 0 : index
    %c0_76 = arith.constant 0 : index
    %269 = vector.load %arg6[%c0_75, %c0_76] : memref<8x32xf32, #tpu.memory_space<vmem>>, vector<8x32xf32>
    tpu.vector_store %arg6[%c0_75, %c0_76], %268 {strides = array<i32>} : memref<8x32xf32, #tpu.memory_space<vmem>>, vector<8x32xf32>,
    %c0_77 = arith.constant 0 : index
    %c0_78 = arith.constant 0 : index
    %270 = vector.load %arg7[%c0_77, %c0_78] : memref<1x32xf32, #tpu.memory_space<vmem>>, vector<1x32xf32>
    tpu.vector_store %arg7[%c0_77, %c0_78], %267 {strides = array<i32>} : memref<1x32xf32, #tpu.memory_space<vmem>>, vector<1x32xf32>,
    return
  }
}

</mosaic_0001>

<llo_original>
// kernel: tpu_custom_call.1
$region0: #{tpu_custom_call.1}
  #allocation0 [shape = 'u32[]', space=smem, size = 0x4, offset = 0x4, fixed_abs, tag = 'smem constant byte address 0x4 - core index']
  #allocation1 [shape = 'u32[144,128]{1,0:T(1,128)}', space=vmem, size = 0x12000, scoped, tag = 'internal scratch']
  %s0 = inlined_call_operand.vmem [shape: s32[8,1], index: 0, kind: input, shape index: {}]
  %s1 = inlined_call_operand.vmem [shape: f32[50,32], index: 1, kind: input, shape index: {}]
  %s2 = inlined_call_operand.vmem [shape: f32[96,32], index: 2, kind: input, shape index: {}]
  %s3 = inlined_call_operand.vmem [shape: f32[96,32], index: 3, kind: input, shape index: {}]
  %s4 = inlined_call_operand.vmem [shape: f32[3,32], index: 4, kind: input, shape index: {}]
  %s5 = inlined_call_operand.vmem [shape: f32[3,32], index: 5, kind: input, shape index: {}]
  %s6 = inlined_call_operand.hbm [shape: f32[8,32], index: 6, kind: output, shape index: {0}]
  %s7 = inlined_call_operand.hbm [shape: f32[1,32], index: 7, kind: output, shape index: {1}]
  %8 = xla_tuple %s6, %s7
  %s9 = sld [smem:[#allocation0]]
  $region42: #{tpu_custom_call.1} parent=0
    _
  %s11 = ssub.s32 1, %s9
  %s12 = scalar_select 0, %s11, %s9
  $region1: #{tpu_custom_call.1} parent=0
    #allocation2 [shape = 'u8[4096]{0}', space=vmem, size = 0x1000, scoped, tag = 'output window, operand 0, single buffered']
    #allocation3 [shape = 's32[1]{0}', space=sflag, size = 0x4, scoped, tag = 'scoped memory for tpu_custom_call.1']
    #allocation4 [shape = 'u8[512]{0}', space=vmem, size = 0x400, scoped, tag = 'output window, operand 1, single buffered']
    #allocation5 [shape = 's32[1]{0}', space=sflag, size = 0x4, scoped, tag = 'scoped memory for tpu_custom_call.1']
    %13 = vsyncpa [#allocation3], 0
    %14 = vsyncpa [#allocation5], 0
    // Predicated region
    $region2: #{tpu_custom_call.1} parent=1 // pred_check
      _
    $region3: #{tpu_custom_call.1} parent=1 // pred_check_branch
      %16 = sbr.rel (0) target = $region5
    $region4: #{tpu_custom_call.1} parent=1 // pred_region
      _
    $region5: #{tpu_custom_call.1} parent=1 // pred_fallthru
      _
    // Predicated region
    $region6: #{tpu_custom_call.1} parent=1 // pred_check
      _
    $region7: #{tpu_custom_call.1} parent=1 // pred_check_branch
      %18 = sbr.rel (0) target = $region9
    $region8: #{tpu_custom_call.1} parent=1 // pred_region
      _
    $region9: #{tpu_custom_call.1} parent=1 // pred_fallthru
      _
    // Predicated region
    $region10: #{tpu_custom_call.1} parent=1 // pred_check
      _
    $region11: #{tpu_custom_call.1} parent=1 // pred_check_branch
      %20 = sbr.rel (0) target = $region13
    $region12: #{tpu_custom_call.1} parent=1 // pred_region
      _
    $region13: #{tpu_custom_call.1} parent=1 // pred_fallthru
      _
    // Predicated region
    $region14: #{tpu_custom_call.1} parent=1 // pred_check
      _
    $region15: #{tpu_custom_call.1} parent=1 // pred_check_branch
      %22 = sbr.rel (0) target = $region17
    $region16: #{tpu_custom_call.1} parent=1 // pred_region
      _
    $region17: #{tpu_custom_call.1} parent=1 // pred_fallthru
      _
    // Predicated region
    $region18: #{tpu_custom_call.1} parent=1 // pred_check
      _
    $region19: #{tpu_custom_call.1} parent=1 // pred_check_branch
      %24 = sbr.rel (0) target = $region21
    $region20: #{tpu_custom_call.1} parent=1 // pred_region
      _
    $region21: #{tpu_custom_call.1} parent=1 // pred_fallthru
      _
    // Predicated region
    $region22: #{tpu_custom_call.1} parent=1 // pred_check
      _
    $region23: #{tpu_custom_call.1} parent=1 // pred_check_branch
      %26 = sbr.rel (0) target = $region25
    $region24: #{tpu_custom_call.1} parent=1 // pred_region
      _
    $region25: #{tpu_custom_call.1} parent=1 // pred_fallthru
      _
    %v27 = vld [vmem:[%s0] sm:$0xff]
    %v28 = vlaneseq
    %v29 = vand.u32 %v28, 127
    %30 = vset.pattern.permute.xlu0 0
    %31 = vperm.xlu0 %30, %v27
    %v32 = vpop.permute.xlu0 %31
    %vm33 = vcmp.eq.s32.totalorder %v29, %v32
    %v34 = vsel %vm33, 1, 0
    %v35 = vcvt.s32.f32 %v34
    %v36 = vld [vmem:[%s1] sm:$0xff]
    %v37 = vld [vmem:[%s1 + $0x8] sm:$0xff]
    %v38 = vld [vmem:[%s1 + $0x10] sm:$0xff]
    %v39 = vld [vmem:[%s1 + $0x18] sm:$0xff]
    %v40 = vld [vmem:[%s1 + $0x20] sm:$0xff]
    %v41 = vld [vmem:[%s1 + $0x28] sm:$0xff]
    %v42 = vld [vmem:[%s1 + $0x30] sm:$0x3]
    %vm43 = vcmask 408576
    %v45 = vsel %vm43, %v35, 0
    %vm47 = vcmask 1041408
    %v49 = vsel %vm47, %v42, 0
    %51 = vmatprep.subr.mxu0 0.0
    %52 = vmatpush1.msra.mxu0 0.0
    %53 = vmatprep.subr.mxu0 0.0
    %54 = vmatpush1.msra.mxu0 0.0
    %55 = vmatprep.subr.mxu0 0.0
    %56 = vmatpush1.msra.mxu0 0.0
    %57 = vmatprep.subr.mxu0 0.0
    %58 = vmatpush1.msra.mxu0 0.0
    %59 = vmatprep.subr.mxu0 0.0
    %60 = vmatpush1.msra.mxu0 0.0
    %61 = vmatprep.subr.mxu0 0.0
    %62 = vmatpush1.msra.mxu0 0.0
    %63 = vmatprep.subr.mxu0 0.0
    %64 = vmatpush1.msra.mxu0 0.0
    %65 = vmatprep.subr.mxu0 0.0
    %66 = vmatpush1.msra.mxu0 0.0
    %67 = vmatprep.subr.mxu0 0.0
    %68 = vmatpush1.msra.mxu0 0.0
    %69 = vmatprep.subr.mxu0 0.0
    %70 = vmatpush1.msra.mxu0 %v49
    %71 = vmatprep.subr.mxu0 0.0
    %72 = vmatpush1.msra.mxu0 %v41
    %73 = vmatprep.subr.mxu0 0.0
    %74 = vmatpush1.msra.mxu0 %v40
    %75 = vmatprep.subr.mxu0 0.0
    %76 = vmatpush1.msra.mxu0 %v39
    %77 = vmatprep.subr.mxu0 0.0
    %78 = vmatpush1.msra.mxu0 %v38
    %79 = vmatprep.subr.mxu0 0.0
    %80 = vmatpush1.msra.mxu0 %v37
    %81 = vmatprep.subr.mxu0 0.0
    %82 = vmatpush1.msra.mxu0 %v36
    %83 = vmatprep.subr.mxu0 0.0
    %84 = vmatpush2.msra.mxu0 0.0
    %85 = vmatprep.subr.mxu0 0.0
    %86 = vmatpush2.msra.mxu0 0.0
    %87 = vmatprep.subr.mxu0 0.0
    %88 = vmatpush2.msra.mxu0 0.0
    %89 = vmatprep.subr.mxu0 0.0
    %90 = vmatpush2.msra.mxu0 0.0
    %91 = vmatprep.subr.mxu0 0.0
    %92 = vmatpush2.msra.mxu0 0.0
    %93 = vmatprep.subr.mxu0 0.0
    %94 = vmatpush2.msra.mxu0 0.0
    %95 = vmatprep.subr.mxu0 0.0
    %96 = vmatpush2.msra.mxu0 0.0
    %97 = vmatprep.subr.mxu0 0.0
    %98 = vmatpush2.msra.mxu0 0.0
    %99 = vmatprep.subr.mxu0 0.0
    %100 = vmatpush2.msra.mxu0 0.0
    %101 = vmatprep.subr.mxu0 0.0
    %102 = vmatpush2.msra.mxu0 0.0
    %103 = vmatprep.subr.mxu0 0.0
    %104 = vmatpush2.msra.mxu0 0.0
    %105 = vmatprep.subr.mxu0 0.0
    %106 = vmatpush2.msra.mxu0 0.0
    %107 = vmatprep.subr.mxu0 0.0
    %108 = vmatpush2.msra.mxu0 0.0
    %109 = vmatprep.subr.mxu0 0.0
    %110 = vmatpush2.msra.mxu0 0.0
    %111 = vmatprep.subr.mxu0 0.0
    %112 = vmatpush2.msra.mxu0 0.0
    %113 = vmatprep.subr.mxu0 0.0
    %114 = vmatpush2.msra.mxu0 0.0
    %115 = vmatprep.mubr.f32.mxu0 0.0
    %116 = vmatmul.mubr.f32.gmra.mxu0 %v45
    %v117 = vpop.f32.mrf.mxu0
    %v118 = vadd.f32 0.0, %v117
    %v119 = vpop.f32.mrf.mxu0
    %120 = vdwg.mxu0
    %v121 = vld [vmem:[%s2] sm:$0xff]
    %v122 = vld [vmem:[%s2 + $0x8] sm:$0xff]
    %v123 = vld [vmem:[%s2 + $0x10] sm:$0xff]
    %v124 = vld [vmem:[%s2 + $0x18] sm:$0xff]
    %v125 = vld [vmem:[%s4] sm:$0x1]
    %v126 = vlaneseq
    %v127 = vshrl.u32 %v126, 7
    %v128 = vsub.s32 0, %v127
    %v129 = vrot.slane %v125, %v128
    %vm130 = vcmask 261120
    %v132 = vsel %vm130, %v118, 0
    %v135 = vsel %vm130, %v121, 0
    %v138 = vsel %vm130, %v122, 0
    %v141 = vsel %vm130, %v123, 0
    %v144 = vsel %vm130, %v124, 0
    %146 = vmatprep.subr.mxu0 0.0
    %147 = vmatpush1.xpose.msra.mxu0 0.0
    %148 = vmatprep.subr.mxu0 0.0
    %149 = vmatpush1.xpose.msra.mxu0 0.0
    %150 = vmatprep.subr.mxu0 0.0
    %151 = vmatpush1.xpose.msra.mxu0 0.0
    %152 = vmatprep.subr.mxu0 0.0
    %153 = vmatpush1.xpose.msra.mxu0 0.0
    %154 = vmatprep.subr.mxu0 0.0
    %155 = vmatpush1.xpose.msra.mxu0 0.0
    %156 = vmatprep.subr.mxu0 0.0
    %157 = vmatpush1.xpose.msra.mxu0 0.0
    %158 = vmatprep.subr.mxu0 0.0
    %159 = vmatpush1.xpose.msra.mxu0 0.0
    %160 = vmatprep.subr.mxu0 0.0
    %161 = vmatpush1.xpose.msra.mxu0 0.0
    %162 = vmatprep.subr.mxu0 0.0
    %163 = vmatpush1.xpose.msra.mxu0 0.0
    %164 = vmatprep.subr.mxu0 0.0
    %165 = vmatpush1.xpose.msra.mxu0 0.0
    %166 = vmatprep.subr.mxu0 0.0
    %167 = vmatpush1.xpose.msra.mxu0 0.0
    %168 = vmatprep.subr.mxu0 0.0
    %169 = vmatpush1.xpose.msra.mxu0 0.0
    %170 = vmatprep.subr.mxu0 0.0
    %171 = vmatpush1.xpose.msra.mxu0 %v144
    %172 = vmatprep.subr.mxu0 0.0
    %173 = vmatpush1.xpose.msra.mxu0 %v141
    %174 = vmatprep.subr.mxu0 0.0
    %175 = vmatpush1.xpose.msra.mxu0 %v138
    %176 = vmatprep.subr.mxu0 0.0
    %177 = vmatpush1.xpose.msra.mxu0 %v135
    %178 = vmatprep.subr.mxu0 0.0
    %179 = vmatpush2.xpose.msra.mxu0 0.0
    %180 = vmatprep.subr.mxu0 0.0
    %181 = vmatpush2.xpose.msra.mxu0 0.0
    %182 = vmatprep.subr.mxu0 0.0
    %183 = vmatpush2.xpose.msra.mxu0 0.0
    %184 = vmatprep.subr.mxu0 0.0
    %185 = vmatpush2.xpose.msra.mxu0 0.0
    %186 = vmatprep.subr.mxu0 0.0
    %187 = vmatpush2.xpose.msra.mxu0 0.0
    %188 = vmatprep.subr.mxu0 0.0
    %189 = vmatpush2.xpose.msra.mxu0 0.0
    %190 = vmatprep.subr.mxu0 0.0
    %191 = vmatpush2.xpose.msra.mxu0 0.0
    %192 = vmatprep.subr.mxu0 0.0
    %193 = vmatpush2.xpose.msra.mxu0 0.0
    %194 = vmatprep.subr.mxu0 0.0
    %195 = vmatpush2.xpose.msra.mxu0 0.0
    %196 = vmatprep.subr.mxu0 0.0
    %197 = vmatpush2.xpose.msra.mxu0 0.0
    %198 = vmatprep.subr.mxu0 0.0
    %199 = vmatpush2.xpose.msra.mxu0 0.0
    %200 = vmatprep.subr.mxu0 0.0
    %201 = vmatpush2.xpose.msra.mxu0 0.0
    %202 = vmatprep.subr.mxu0 0.0
    %203 = vmatpush2.xpose.msra.mxu0 0.0
    %204 = vmatprep.subr.mxu0 0.0
    %205 = vmatpush2.xpose.msra.mxu0 0.0
    %206 = vmatprep.subr.mxu0 0.0
    %207 = vmatpush2.xpose.msra.mxu0 0.0
    %208 = vmatprep.subr.mxu0 0.0
    %209 = vmatpush2.xpose.msra.mxu0 0.0
    %210 = vmatprep.mubr.f32.mxu0 0.0
    %211 = vmatmul.mubr.f32.gmra.mxu0 %v132
    %v212 = vpop.f32.mrf.mxu0
    %v213 = vadd.f32 %v129, %v212
    %v214 = vpop.f32.mrf.mxu0
    %215 = vdwg.mxu0
    %v216 = vld [vmem:[%s2 + $0x20] sm:$0xff]
    %v217 = vld [vmem:[%s2 + $0x28] sm:$0xff]
    %v218 = vld [vmem:[%s2 + $0x30] sm:$0xff]
    %v219 = vld [vmem:[%s2 + $0x38] sm:$0xff]
    %v220 = vld [vmem:[%s4 + $0x1] sm:$0x1]
    %v221 = vlaneseq
    %v222 = vshrl.u32 %v221, 7
    %v223 = vsub.s32 0, %v222
    %v224 = vrot.slane %v220, %v223
    %v226 = vsel %vm130, %v216, 0
    %v229 = vsel %vm130, %v217, 0
    %v232 = vsel %vm130, %v218, 0
    %v235 = vsel %vm130, %v219, 0
    %237 = vmatprep.subr.mxu0 0.0
    %238 = vmatpush1.xpose.msra.mxu0 0.0
    %239 = vmatprep.subr.mxu0 0.0
    %240 = vmatpush1.xpose.msra.mxu0 0.0
    %241 = vmatprep.subr.mxu0 0.0
    %242 = vmatpush1.xpose.msra.mxu0 0.0
    %243 = vmatprep.subr.mxu0 0.0
    %244 = vmatpush1.xpose.msra.mxu0 0.0
    %245 = vmatprep.subr.mxu0 0.0
    %246 = vmatpush1.xpose.msra.mxu0 0.0
    %247 = vmatprep.subr.mxu0 0.0
    %248 = vmatpush1.xpose.msra.mxu0 0.0
    %249 = vmatprep.subr.mxu0 0.0
    %250 = vmatpush1.xpose.msra.mxu0 0.0
    %251 = vmatprep.subr.mxu0 0.0
    %252 = vmatpush1.xpose.msra.mxu0 0.0
    %253 = vmatprep.subr.mxu0 0.0
    %254 = vmatpush1.xpose.msra.mxu0 0.0
    %255 = vmatprep.subr.mxu0 0.0
    %256 = vmatpush1.xpose.msra.mxu0 0.0
    %257 = vmatprep.subr.mxu0 0.0
    %258 = vmatpush1.xpose.msra.mxu0 0.0
    %259 = vmatprep.subr.mxu0 0.0
    %260 = vmatpush1.xpose.msra.mxu0 0.0
    %261 = vmatprep.subr.mxu0 0.0
    %262 = vmatpush1.xpose.msra.mxu0 %v235
    %263 = vmatprep.subr.mxu0 0.0
    %264 = vmatpush1.xpose.msra.mxu0 %v232
    %265 = vmatprep.subr.mxu0 0.0
    %266 = vmatpush1.xpose.msra.mxu0 %v229
    %267 = vmatprep.subr.mxu0 0.0
    %268 = vmatpush1.xpose.msra.mxu0 %v226
    %269 = vmatprep.subr.mxu0 0.0
    %270 = vmatpush2.xpose.msra.mxu0 0.0
    %271 = vmatprep.subr.mxu0 0.0
    %272 = vmatpush2.xpose.msra.mxu0 0.0
    %273 = vmatprep.subr.mxu0 0.0
    %274 = vmatpush2.xpose.msra.mxu0 0.0
    %275 = vmatprep.subr.mxu0 0.0
    %276 = vmatpush2.xpose.msra.mxu0 0.0
    %277 = vmatprep.subr.mxu0 0.0
    %278 = vmatpush2.xpose.msra.mxu0 0.0
    %279 = vmatprep.subr.mxu0 0.0
    %280 = vmatpush2.xpose.msra.mxu0 0.0
    %281 = vmatprep.subr.mxu0 0.0
    %282 = vmatpush2.xpose.msra.mxu0 0.0
    %283 = vmatprep.subr.mxu0 0.0
    %284 = vmatpush2.xpose.msra.mxu0 0.0
    %285 = vmatprep.subr.mxu0 0.0
    %286 = vmatpush2.xpose.msra.mxu0 0.0
    %287 = vmatprep.subr.mxu0 0.0
    %288 = vmatpush2.xpose.msra.mxu0 0.0
    %289 = vmatprep.subr.mxu0 0.0
    %290 = vmatpush2.xpose.msra.mxu0 0.0
    %291 = vmatprep.subr.mxu0 0.0
    %292 = vmatpush2.xpose.msra.mxu0 0.0
    %293 = vmatprep.subr.mxu0 0.0
    %294 = vmatpush2.xpose.msra.mxu0 0.0
    %295 = vmatprep.subr.mxu0 0.0
    %296 = vmatpush2.xpose.msra.mxu0 0.0
    %297 = vmatprep.subr.mxu0 0.0
    %298 = vmatpush2.xpose.msra.mxu0 0.0
    %299 = vmatprep.subr.mxu0 0.0
    %300 = vmatpush2.xpose.msra.mxu0 0.0
    %301 = vmatprep.mubr.f32.mxu0 0.0
    %302 = vmatmul.mubr.f32.gmra.mxu0 %v132
    %v303 = vpop.f32.mrf.mxu0
    %v304 = vadd.f32 %v224, %v303
    %v305 = vpop.f32.mrf.mxu0
    %306 = vdwg.mxu0
    %v307 = vld [vmem:[%s2 + $0x40] sm:$0xff]
    %v308 = vld [vmem:[%s2 + $0x48] sm:$0xff]
    %v309 = vld [vmem:[%s2 + $0x50] sm:$0xff]
    %v310 = vld [vmem:[%s2 + $0x58] sm:$0xff]
    %v311 = vld [vmem:[%s4 + $0x2] sm:$0x1]
    %v312 = vlaneseq
    %v313 = vshrl.u32 %v312, 7
    %v314 = vsub.s32 0, %v313
    %v315 = vrot.slane %v311, %v314
    %v317 = vsel %vm130, %v307, 0
    %v320 = vsel %vm130, %v308, 0
    %v323 = vsel %vm130, %v309, 0
    %v326 = vsel %vm130, %v310, 0
    %328 = vmatprep.subr.mxu0 0.0
    %329 = vmatpush1.xpose.msra.mxu0 0.0
    %330 = vmatprep.subr.mxu0 0.0
    %331 = vmatpush1.xpose.msra.mxu0 0.0
    %332 = vmatprep.subr.mxu0 0.0
    %333 = vmatpush1.xpose.msra.mxu0 0.0
    %334 = vmatprep.subr.mxu0 0.0
    %335 = vmatpush1.xpose.msra.mxu0 0.0
    %336 = vmatprep.subr.mxu0 0.0
    %337 = vmatpush1.xpose.msra.mxu0 0.0
    %338 = vmatprep.subr.mxu0 0.0
    %339 = vmatpush1.xpose.msra.mxu0 0.0
    %340 = vmatprep.subr.mxu0 0.0
    %341 = vmatpush1.xpose.msra.mxu0 0.0
    %342 = vmatprep.subr.mxu0 0.0
    %343 = vmatpush1.xpose.msra.mxu0 0.0
    %344 = vmatprep.subr.mxu0 0.0
    %345 = vmatpush1.xpose.msra.mxu0 0.0
    %346 = vmatprep.subr.mxu0 0.0
    %347 = vmatpush1.xpose.msra.mxu0 0.0
    %348 = vmatprep.subr.mxu0 0.0
    %349 = vmatpush1.xpose.msra.mxu0 0.0
    %350 = vmatprep.subr.mxu0 0.0
    %351 = vmatpush1.xpose.msra.mxu0 0.0
    %352 = vmatprep.subr.mxu0 0.0
    %353 = vmatpush1.xpose.msra.mxu0 %v326
    %354 = vmatprep.subr.mxu0 0.0
    %355 = vmatpush1.xpose.msra.mxu0 %v323
    %356 = vmatprep.subr.mxu0 0.0
    %357 = vmatpush1.xpose.msra.mxu0 %v320
    %358 = vmatprep.subr.mxu0 0.0
    %359 = vmatpush1.xpose.msra.mxu0 %v317
    %360 = vmatprep.subr.mxu0 0.0
    %361 = vmatpush2.xpose.msra.mxu0 0.0
    %362 = vmatprep.subr.mxu0 0.0
    %363 = vmatpush2.xpose.msra.mxu0 0.0
    %364 = vmatprep.subr.mxu0 0.0
    %365 = vmatpush2.xpose.msra.mxu0 0.0
    %366 = vmatprep.subr.mxu0 0.0
    %367 = vmatpush2.xpose.msra.mxu0 0.0
    %368 = vmatprep.subr.mxu0 0.0
    %369 = vmatpush2.xpose.msra.mxu0 0.0
    %370 = vmatprep.subr.mxu0 0.0
    %371 = vmatpush2.xpose.msra.mxu0 0.0
    %372 = vmatprep.subr.mxu0 0.0
    %373 = vmatpush2.xpose.msra.mxu0 0.0
    %374 = vmatprep.subr.mxu0 0.0
    %375 = vmatpush2.xpose.msra.mxu0 0.0
    %376 = vmatprep.subr.mxu0 0.0
    %377 = vmatpush2.xpose.msra.mxu0 0.0
    %378 = vmatprep.subr.mxu0 0.0
    %379 = vmatpush2.xpose.msra.mxu0 0.0
    %380 = vmatprep.subr.mxu0 0.0
    %381 = vmatpush2.xpose.msra.mxu0 0.0
    %382 = vmatprep.subr.mxu0 0.0
    %383 = vmatpush2.xpose.msra.mxu0 0.0
    %384 = vmatprep.subr.mxu0 0.0
    %385 = vmatpush2.xpose.msra.mxu0 0.0
    %386 = vmatprep.subr.mxu0 0.0
    %387 = vmatpush2.xpose.msra.mxu0 0.0
    %388 = vmatprep.subr.mxu0 0.0
    %389 = vmatpush2.xpose.msra.mxu0 0.0
    %390 = vmatprep.subr.mxu0 0.0
    %391 = vmatpush2.xpose.msra.mxu0 0.0
    %392 = vmatprep.mubr.f32.mxu0 0.0
    %393 = vmatmul.mubr.f32.gmra.mxu0 %v132
    %v394 = vpop.f32.mrf.mxu0
    %v395 = vadd.f32 %v315, %v394
    %v396 = vpop.f32.mrf.mxu0
    %397 = vdwg.mxu0
    %v398 = vld [vmem:[%s3] sm:$0xff]
    %v399 = vld [vmem:[%s3 + $0x8] sm:$0xff]
    %v400 = vld [vmem:[%s3 + $0x10] sm:$0xff]
    %v401 = vld [vmem:[%s3 + $0x18] sm:$0xff]
    %v402 = vld [vmem:[%s3 + $0x20] sm:$0xff]
    %v403 = vld [vmem:[%s3 + $0x28] sm:$0xff]
    %v404 = vld [vmem:[%s3 + $0x30] sm:$0xff]
    %v405 = vld [vmem:[%s3 + $0x38] sm:$0xff]
    %v406 = vld [vmem:[%s3 + $0x40] sm:$0xff]
    %v407 = vld [vmem:[%s3 + $0x48] sm:$0xff]
    %v408 = vld [vmem:[%s3 + $0x50] sm:$0xff]
    %v409 = vld [vmem:[%s3 + $0x58] sm:$0xff]
    %v410 = vld [vmem:[%s5] sm:$0x1]
    %v411 = vld [vmem:[%s5 + $0x1] sm:$0x1]
    %v412 = vld [vmem:[%s5 + $0x2] sm:$0x1]
    %v414 = vsel %vm130, 0.0, 0
    %v417 = vsel %vm130, %v398, 0
    %v420 = vsel %vm130, %v399, 0
    %v423 = vsel %vm130, %v400, 0
    %v426 = vsel %vm130, %v401, 0
    %428 = vmatprep.subr.mxu0 0.0
    %429 = vmatpush1.xpose.msra.mxu0 0.0
    %430 = vmatprep.subr.mxu0 0.0
    %431 = vmatpush1.xpose.msra.mxu0 0.0
    %432 = vmatprep.subr.mxu0 0.0
    %433 = vmatpush1.xpose.msra.mxu0 0.0
    %434 = vmatprep.subr.mxu0 0.0
    %435 = vmatpush1.xpose.msra.mxu0 0.0
    %436 = vmatprep.subr.mxu0 0.0
    %437 = vmatpush1.xpose.msra.mxu0 0.0
    %438 = vmatprep.subr.mxu0 0.0
    %439 = vmatpush1.xpose.msra.mxu0 0.0
    %440 = vmatprep.subr.mxu0 0.0
    %441 = vmatpush1.xpose.msra.mxu0 0.0
    %442 = vmatprep.subr.mxu0 0.0
    %443 = vmatpush1.xpose.msra.mxu0 0.0
    %444 = vmatprep.subr.mxu0 0.0
    %445 = vmatpush1.xpose.msra.mxu0 0.0
    %446 = vmatprep.subr.mxu0 0.0
    %447 = vmatpush1.xpose.msra.mxu0 0.0
    %448 = vmatprep.subr.mxu0 0.0
    %449 = vmatpush1.xpose.msra.mxu0 0.0
    %450 = vmatprep.subr.mxu0 0.0
    %451 = vmatpush1.xpose.msra.mxu0 0.0
    %452 = vmatprep.subr.mxu0 0.0
    %453 = vmatpush1.xpose.msra.mxu0 %v426
    %454 = vmatprep.subr.mxu0 0.0
    %455 = vmatpush1.xpose.msra.mxu0 %v423
    %456 = vmatprep.subr.mxu0 0.0
    %457 = vmatpush1.xpose.msra.mxu0 %v420
    %458 = vmatprep.subr.mxu0 0.0
    %459 = vmatpush1.xpose.msra.mxu0 %v417
    %460 = vmatprep.subr.mxu0 0.0
    %461 = vmatpush2.xpose.msra.mxu0 0.0
    %462 = vmatprep.subr.mxu0 0.0
    %463 = vmatpush2.xpose.msra.mxu0 0.0
    %464 = vmatprep.subr.mxu0 0.0
    %465 = vmatpush2.xpose.msra.mxu0 0.0
    %466 = vmatprep.subr.mxu0 0.0
    %467 = vmatpush2.xpose.msra.mxu0 0.0
    %468 = vmatprep.subr.mxu0 0.0
    %469 = vmatpush2.xpose.msra.mxu0 0.0
    %470 = vmatprep.subr.mxu0 0.0
    %471 = vmatpush2.xpose.msra.mxu0 0.0
    %472 = vmatprep.subr.mxu0 0.0
    %473 = vmatpush2.xpose.msra.mxu0 0.0
    %474 = vmatprep.subr.mxu0 0.0
    %475 = vmatpush2.xpose.msra.mxu0 0.0
    %476 = vmatprep.subr.mxu0 0.0
    %477 = vmatpush2.xpose.msra.mxu0 0.0
    %478 = vmatprep.subr.mxu0 0.0
    %479 = vmatpush2.xpose.msra.mxu0 0.0
    %480 = vmatprep.subr.mxu0 0.0
    %481 = vmatpush2.xpose.msra.mxu0 0.0
    %482 = vmatprep.subr.mxu0 0.0
    %483 = vmatpush2.xpose.msra.mxu0 0.0
    %484 = vmatprep.subr.mxu0 0.0
    %485 = vmatpush2.xpose.msra.mxu0 0.0
    %486 = vmatprep.subr.mxu0 0.0
    %487 = vmatpush2.xpose.msra.mxu0 0.0
    %488 = vmatprep.subr.mxu0 0.0
    %489 = vmatpush2.xpose.msra.mxu0 0.0
    %490 = vmatprep.subr.mxu0 0.0
    %491 = vmatpush2.xpose.msra.mxu0 0.0
    %492 = vmatprep.mubr.f32.mxu0 0.0
    %493 = vmatmul.mubr.f32.gmra.mxu0 %v414
    %v494 = vpop.f32.mrf.mxu0
    %v495 = vadd.f32 %v410, %v494
    %v496 = vpop.f32.mrf.mxu0
    %497 = vdwg.mxu0
    %v499 = vsel %vm130, %v402, 0
    %v502 = vsel %vm130, %v403, 0
    %v505 = vsel %vm130, %v404, 0
    %v508 = vsel %vm130, %v405, 0
    %510 = vmatprep.subr.mxu0 0.0
    %511 = vmatpush1.xpose.msra.mxu0 0.0
    %512 = vmatprep.subr.mxu0 0.0
    %513 = vmatpush1.xpose.msra.mxu0 0.0
    %514 = vmatprep.subr.mxu0 0.0
    %515 = vmatpush1.xpose.msra.mxu0 0.0
    %516 = vmatprep.subr.mxu0 0.0
    %517 = vmatpush1.xpose.msra.mxu0 0.0
    %518 = vmatprep.subr.mxu0 0.0
    %519 = vmatpush1.xpose.msra.mxu0 0.0
    %520 = vmatprep.subr.mxu0 0.0
    %521 = vmatpush1.xpose.msra.mxu0 0.0
    %522 = vmatprep.subr.mxu0 0.0
    %523 = vmatpush1.xpose.msra.mxu0 0.0
    %524 = vmatprep.subr.mxu0 0.0
    %525 = vmatpush1.xpose.msra.mxu0 0.0
    %526 = vmatprep.subr.mxu0 0.0
    %527 = vmatpush1.xpose.msra.mxu0 0.0
    %528 = vmatprep.subr.mxu0 0.0
    %529 = vmatpush1.xpose.msra.mxu0 0.0
    %530 = vmatprep.subr.mxu0 0.0
    %531 = vmatpush1.xpose.msra.mxu0 0.0
    %532 = vmatprep.subr.mxu0 0.0
    %533 = vmatpush1.xpose.msra.mxu0 0.0
    %534 = vmatprep.subr.mxu0 0.0
    %535 = vmatpush1.xpose.msra.mxu0 %v508
    %536 = vmatprep.subr.mxu0 0.0
    %537 = vmatpush1.xpose.msra.mxu0 %v505
    %538 = vmatprep.subr.mxu0 0.0
    %539 = vmatpush1.xpose.msra.mxu0 %v502
    %540 = vmatprep.subr.mxu0 0.0
    %541 = vmatpush1.xpose.msra.mxu0 %v499
    %542 = vmatprep.subr.mxu0 0.0
    %543 = vmatpush2.xpose.msra.mxu0 0.0
    %544 = vmatprep.subr.mxu0 0.0
    %545 = vmatpush2.xpose.msra.mxu0 0.0
    %546 = vmatprep.subr.mxu0 0.0
    %547 = vmatpush2.xpose.msra.mxu0 0.0
    %548 = vmatprep.subr.mxu0 0.0
    %549 = vmatpush2.xpose.msra.mxu0 0.0
    %550 = vmatprep.subr.mxu0 0.0
    %551 = vmatpush2.xpose.msra.mxu0 0.0
    %552 = vmatprep.subr.mxu0 0.0
    %553 = vmatpush2.xpose.msra.mxu0 0.0
    %554 = vmatprep.subr.mxu0 0.0
    %555 = vmatpush2.xpose.msra.mxu0 0.0
    %556 = vmatprep.subr.mxu0 0.0
    %557 = vmatpush2.xpose.msra.mxu0 0.0
    %558 = vmatprep.subr.mxu0 0.0
    %559 = vmatpush2.xpose.msra.mxu0 0.0
    %560 = vmatprep.subr.mxu0 0.0
    %561 = vmatpush2.xpose.msra.mxu0 0.0
    %562 = vmatprep.subr.mxu0 0.0
    %563 = vmatpush2.xpose.msra.mxu0 0.0
    %564 = vmatprep.subr.mxu0 0.0
    %565 = vmatpush2.xpose.msra.mxu0 0.0
    %566 = vmatprep.subr.mxu0 0.0
    %567 = vmatpush2.xpose.msra.mxu0 0.0
    %568 = vmatprep.subr.mxu0 0.0
    %569 = vmatpush2.xpose.msra.mxu0 0.0
    %570 = vmatprep.subr.mxu0 0.0
    %571 = vmatpush2.xpose.msra.mxu0 0.0
    %572 = vmatprep.subr.mxu0 0.0
    %573 = vmatpush2.xpose.msra.mxu0 0.0
    %574 = vmatprep.mubr.f32.mxu0 0.0
    %575 = vmatmul.mubr.f32.gmra.mxu0 %v414
    %v576 = vpop.f32.mrf.mxu0
    %v577 = vadd.f32 %v411, %v576
    %v578 = vpop.f32.mrf.mxu0
    %579 = vdwg.mxu0
    %v581 = vsel %vm130, %v406, 0
    %v584 = vsel %vm130, %v407, 0
    %v587 = vsel %vm130, %v408, 0
    %v590 = vsel %vm130, %v409, 0
    %592 = vmatprep.subr.mxu0 0.0
    %593 = vmatpush1.xpose.msra.mxu0 0.0
    %594 = vmatprep.subr.mxu0 0.0
    %595 = vmatpush1.xpose.msra.mxu0 0.0
    %596 = vmatprep.subr.mxu0 0.0
    %597 = vmatpush1.xpose.msra.mxu0 0.0
    %598 = vmatprep.subr.mxu0 0.0
    %599 = vmatpush1.xpose.msra.mxu0 0.0
    %600 = vmatprep.subr.mxu0 0.0
    %601 = vmatpush1.xpose.msra.mxu0 0.0
    %602 = vmatprep.subr.mxu0 0.0
    %603 = vmatpush1.xpose.msra.mxu0 0.0
    %604 = vmatprep.subr.mxu0 0.0
    %605 = vmatpush1.xpose.msra.mxu0 0.0
    %606 = vmatprep.subr.mxu0 0.0
    %607 = vmatpush1.xpose.msra.mxu0 0.0
    %608 = vmatprep.subr.mxu0 0.0
    %609 = vmatpush1.xpose.msra.mxu0 0.0
    %610 = vmatprep.subr.mxu0 0.0
    %611 = vmatpush1.xpose.msra.mxu0 0.0
    %612 = vmatprep.subr.mxu0 0.0
    %613 = vmatpush1.xpose.msra.mxu0 0.0
    %614 = vmatprep.subr.mxu0 0.0
    %615 = vmatpush1.xpose.msra.mxu0 0.0
    %616 = vmatprep.subr.mxu0 0.0
    %617 = vmatpush1.xpose.msra.mxu0 %v590
    %618 = vmatprep.subr.mxu0 0.0
    %619 = vmatpush1.xpose.msra.mxu0 %v587
    %620 = vmatprep.subr.mxu0 0.0
    %621 = vmatpush1.xpose.msra.mxu0 %v584
    %622 = vmatprep.subr.mxu0 0.0
    %623 = vmatpush1.xpose.msra.mxu0 %v581
    %624 = vmatprep.subr.mxu0 0.0
    %625 = vmatpush2.xpose.msra.mxu0 0.0
    %626 = vmatprep.subr.mxu0 0.0
    %627 = vmatpush2.xpose.msra.mxu0 0.0
    %628 = vmatprep.subr.mxu0 0.0
    %629 = vmatpush2.xpose.msra.mxu0 0.0
    %630 = vmatprep.subr.mxu0 0.0
    %631 = vmatpush2.xpose.msra.mxu0 0.0
    %632 = vmatprep.subr.mxu0 0.0
    %633 = vmatpush2.xpose.msra.mxu0 0.0
    %634 = vmatprep.subr.mxu0 0.0
    %635 = vmatpush2.xpose.msra.mxu0 0.0
    %636 = vmatprep.subr.mxu0 0.0
    %637 = vmatpush2.xpose.msra.mxu0 0.0
    %638 = vmatprep.subr.mxu0 0.0
    %639 = vmatpush2.xpose.msra.mxu0 0.0
    %640 = vmatprep.subr.mxu0 0.0
    %641 = vmatpush2.xpose.msra.mxu0 0.0
    %642 = vmatprep.subr.mxu0 0.0
    %643 = vmatpush2.xpose.msra.mxu0 0.0
    %644 = vmatprep.subr.mxu0 0.0
    %645 = vmatpush2.xpose.msra.mxu0 0.0
    %646 = vmatprep.subr.mxu0 0.0
    %647 = vmatpush2.xpose.msra.mxu0 0.0
    %648 = vmatprep.subr.mxu0 0.0
    %649 = vmatpush2.xpose.msra.mxu0 0.0
    %650 = vmatprep.subr.mxu0 0.0
    %651 = vmatpush2.xpose.msra.mxu0 0.0
    %652 = vmatprep.subr.mxu0 0.0
    %653 = vmatpush2.xpose.msra.mxu0 0.0
    %654 = vmatprep.subr.mxu0 0.0
    %655 = vmatpush2.xpose.msra.mxu0 0.0
    %656 = vmatprep.mubr.f32.mxu0 0.0
    %657 = vmatmul.mubr.f32.gmra.mxu0 %v414
    %v658 = vpop.f32.mrf.mxu0
    %v659 = vadd.f32 %v412, %v658
    %v660 = vpop.f32.mrf.mxu0
    %661 = vdwg.mxu0
    %v662 = vadd.f32 %v213, %v495
    %v663 = vxor.u32 %v662, 2147483648
    %v664 = vmul.f32 %v663, 1.442695
    %v665 = vpow.pop %v664
    %v666 = vadd.f32 %v665, 1.0
    %v667 = vrcp.pop %v666
    %v668 = vmul.f32 1.0, %v667
    %v669 = vadd.f32 %v304, %v577
    %v670 = vxor.u32 %v669, 2147483648
    %v671 = vmul.f32 %v670, 1.442695
    %v672 = vpow.pop %v671
    %v673 = vadd.f32 %v672, 1.0
    %v674 = vrcp.pop %v673
    %v675 = vmul.f32 1.0, %v674
    %v676 = vmul.f32 %v668, %v659
    %v677 = vadd.f32 %v395, %v676
    %v678 = vtanh.pop %v677
    %v679 = vsub.f32 1.0, %v675
    %v680 = vmul.f32 %v679, %v678
    %v681 = vmul.f32 %v675, 0.0
    %v682 = vadd.f32 %v680, %v681
    %v684 = vsel %vm130, %v682, 0
    %686 = vmatprep.subr.mxu0 0.0
    %687 = vmatpush1.xpose.msra.mxu0 0.0
    %688 = vmatprep.subr.mxu0 0.0
    %689 = vmatpush1.xpose.msra.mxu0 0.0
    %690 = vmatprep.subr.mxu0 0.0
    %691 = vmatpush1.xpose.msra.mxu0 0.0
    %692 = vmatprep.subr.mxu0 0.0
    %693 = vmatpush1.xpose.msra.mxu0 0.0
    %694 = vmatprep.subr.mxu0 0.0
    %695 = vmatpush1.xpose.msra.mxu0 0.0
    %696 = vmatprep.subr.mxu0 0.0
    %697 = vmatpush1.xpose.msra.mxu0 0.0
    %698 = vmatprep.subr.mxu0 0.0
    %699 = vmatpush1.xpose.msra.mxu0 0.0
    %700 = vmatprep.subr.mxu0 0.0
    %701 = vmatpush1.xpose.msra.mxu0 0.0
    %702 = vmatprep.subr.mxu0 0.0
    %703 = vmatpush1.xpose.msra.mxu0 0.0
    %704 = vmatprep.subr.mxu0 0.0
    %705 = vmatpush1.xpose.msra.mxu0 0.0
    %706 = vmatprep.subr.mxu0 0.0
    %707 = vmatpush1.xpose.msra.mxu0 0.0
    %708 = vmatprep.subr.mxu0 0.0
    %709 = vmatpush1.xpose.msra.mxu0 0.0
    %710 = vmatprep.subr.mxu0 0.0
    %711 = vmatpush1.xpose.msra.mxu0 %v426
    %712 = vmatprep.subr.mxu0 0.0
    %713 = vmatpush1.xpose.msra.mxu0 %v423
    %714 = vmatprep.subr.mxu0 0.0
    %715 = vmatpush1.xpose.msra.mxu0 %v420
    %716 = vmatprep.subr.mxu0 0.0
    %717 = vmatpush1.xpose.msra.mxu0 %v417
    %718 = vmatprep.subr.mxu0 0.0
    %719 = vmatpush2.xpose.msra.mxu0 0.0
    %720 = vmatprep.subr.mxu0 0.0
    %721 = vmatpush2.xpose.msra.mxu0 0.0
    %722 = vmatprep.subr.mxu0 0.0
    %723 = vmatpush2.xpose.msra.mxu0 0.0
    %724 = vmatprep.subr.mxu0 0.0
    %725 = vmatpush2.xpose.msra.mxu0 0.0
    %726 = vmatprep.subr.mxu0 0.0
    %727 = vmatpush2.xpose.msra.mxu0 0.0
    %728 = vmatprep.subr.mxu0 0.0
    %729 = vmatpush2.xpose.msra.mxu0 0.0
    %730 = vmatprep.subr.mxu0 0.0
    %731 = vmatpush2.xpose.msra.mxu0 0.0
    %732 = vmatprep.subr.mxu0 0.0
    %733 = vmatpush2.xpose.msra.mxu0 0.0
    %734 = vmatprep.subr.mxu0 0.0
    %735 = vmatpush2.xpose.msra.mxu0 0.0
    %736 = vmatprep.subr.mxu0 0.0
    %737 = vmatpush2.xpose.msra.mxu0 0.0
    %738 = vmatprep.subr.mxu0 0.0
    %739 = vmatpush2.xpose.msra.mxu0 0.0
    %740 = vmatprep.subr.mxu0 0.0
    %741 = vmatpush2.xpose.msra.mxu0 0.0
    %742 = vmatprep.subr.mxu0 0.0
    %743 = vmatpush2.xpose.msra.mxu0 0.0
    %744 = vmatprep.subr.mxu0 0.0
    %745 = vmatpush2.xpose.msra.mxu0 0.0
    %746 = vmatprep.subr.mxu0 0.0
    %747 = vmatpush2.xpose.msra.mxu0 0.0
    %748 = vmatprep.subr.mxu0 0.0
    %749 = vmatpush2.xpose.msra.mxu0 0.0
    %750 = vmatprep.mubr.f32.mxu0 0.0
    %751 = vmatmul.mubr.f32.gmra.mxu0 %v684
    %v752 = vpop.f32.mrf.mxu0
    %v753 = vadd.f32 %v410, %v752
    %v754 = vpop.f32.mrf.mxu0
    %755 = vdwg.mxu0
    %756 = vmatprep.subr.mxu0 0.0
    %757 = vmatpush1.xpose.msra.mxu0 0.0
    %758 = vmatprep.subr.mxu0 0.0
    %759 = vmatpush1.xpose.msra.mxu0 0.0
    %760 = vmatprep.subr.mxu0 0.0
    %761 = vmatpush1.xpose.msra.mxu0 0.0
    %762 = vmatprep.subr.mxu0 0.0
    %763 = vmatpush1.xpose.msra.mxu0 0.0
    %764 = vmatprep.subr.mxu0 0.0
    %765 = vmatpush1.xpose.msra.mxu0 0.0
    %766 = vmatprep.subr.mxu0 0.0
    %767 = vmatpush1.xpose.msra.mxu0 0.0
    %768 = vmatprep.subr.mxu0 0.0
    %769 = vmatpush1.xpose.msra.mxu0 0.0
    %770 = vmatprep.subr.mxu0 0.0
    %771 = vmatpush1.xpose.msra.mxu0 0.0
    %772 = vmatprep.subr.mxu0 0.0
    %773 = vmatpush1.xpose.msra.mxu0 0.0
    %774 = vmatprep.subr.mxu0 0.0
    %775 = vmatpush1.xpose.msra.mxu0 0.0
    %776 = vmatprep.subr.mxu0 0.0
    %777 = vmatpush1.xpose.msra.mxu0 0.0
    %778 = vmatprep.subr.mxu0 0.0
    %779 = vmatpush1.xpose.msra.mxu0 0.0
    %780 = vmatprep.subr.mxu0 0.0
    %781 = vmatpush1.xpose.msra.mxu0 %v508
    %782 = vmatprep.subr.mxu0 0.0
    %783 = vmatpush1.xpose.msra.mxu0 %v505
    %784 = vmatprep.subr.mxu0 0.0
    %785 = vmatpush1.xpose.msra.mxu0 %v502
    %786 = vmatprep.subr.mxu0 0.0
    %787 = vmatpush1.xpose.msra.mxu0 %v499
    %788 = vmatprep.subr.mxu0 0.0
    %789 = vmatpush2.xpose.msra.mxu0 0.0
    %790 = vmatprep.subr.mxu0 0.0
    %791 = vmatpush2.xpose.msra.mxu0 0.0
    %792 = vmatprep.subr.mxu0 0.0
    %793 = vmatpush2.xpose.msra.mxu0 0.0
    %794 = vmatprep.subr.mxu0 0.0
    %795 = vmatpush2.xpose.msra.mxu0 0.0
    %796 = vmatprep.subr.mxu0 0.0
    %797 = vmatpush2.xpose.msra.mxu0 0.0
    %798 = vmatprep.subr.mxu0 0.0
    %799 = vmatpush2.xpose.msra.mxu0 0.0
    %800 = vmatprep.subr.mxu0 0.0
    %801 = vmatpush2.xpose.msra.mxu0 0.0
    %802 = vmatprep.subr.mxu0 0.0
    %803 = vmatpush2.xpose.msra.mxu0 0.0
    %804 = vmatprep.subr.mxu0 0.0
    %805 = vmatpush2.xpose.msra.mxu0 0.0
    %806 = vmatprep.subr.mxu0 0.0
    %807 = vmatpush2.xpose.msra.mxu0 0.0
    %808 = vmatprep.subr.mxu0 0.0
    %809 = vmatpush2.xpose.msra.mxu0 0.0
    %810 = vmatprep.subr.mxu0 0.0
    %811 = vmatpush2.xpose.msra.mxu0 0.0
    %812 = vmatprep.subr.mxu0 0.0
    %813 = vmatpush2.xpose.msra.mxu0 0.0
    %814 = vmatprep.subr.mxu0 0.0
    %815 = vmatpush2.xpose.msra.mxu0 0.0
    %816 = vmatprep.subr.mxu0 0.0
    %817 = vmatpush2.xpose.msra.mxu0 0.0
    %818 = vmatprep.subr.mxu0 0.0
    %819 = vmatpush2.xpose.msra.mxu0 0.0
    %820 = vmatprep.mubr.f32.mxu0 0.0
    %821 = vmatmul.mubr.f32.gmra.mxu0 %v684
    %v822 = vpop.f32.mrf.mxu0
    %v823 = vadd.f32 %v411, %v822
    %v824 = vpop.f32.mrf.mxu0
    %825 = vdwg.mxu0
    %826 = vmatprep.subr.mxu0 0.0
    %827 = vmatpush1.xpose.msra.mxu0 0.0
    %828 = vmatprep.subr.mxu0 0.0
    %829 = vmatpush1.xpose.msra.mxu0 0.0
    %830 = vmatprep.subr.mxu0 0.0
    %831 = vmatpush1.xpose.msra.mxu0 0.0
    %832 = vmatprep.subr.mxu0 0.0
    %833 = vmatpush1.xpose.msra.mxu0 0.0
    %834 = vmatprep.subr.mxu0 0.0
    %835 = vmatpush1.xpose.msra.mxu0 0.0
    %836 = vmatprep.subr.mxu0 0.0
    %837 = vmatpush1.xpose.msra.mxu0 0.0
    %838 = vmatprep.subr.mxu0 0.0
    %839 = vmatpush1.xpose.msra.mxu0 0.0
    %840 = vmatprep.subr.mxu0 0.0
    %841 = vmatpush1.xpose.msra.mxu0 0.0
    %842 = vmatprep.subr.mxu0 0.0
    %843 = vmatpush1.xpose.msra.mxu0 0.0
    %844 = vmatprep.subr.mxu0 0.0
    %845 = vmatpush1.xpose.msra.mxu0 0.0
    %846 = vmatprep.subr.mxu0 0.0
    %847 = vmatpush1.xpose.msra.mxu0 0.0
    %848 = vmatprep.subr.mxu0 0.0
    %849 = vmatpush1.xpose.msra.mxu0 0.0
    %850 = vmatprep.subr.mxu0 0.0
    %851 = vmatpush1.xpose.msra.mxu0 %v590
    %852 = vmatprep.subr.mxu0 0.0
    %853 = vmatpush1.xpose.msra.mxu0 %v587
    %854 = vmatprep.subr.mxu0 0.0
    %855 = vmatpush1.xpose.msra.mxu0 %v584
    %856 = vmatprep.subr.mxu0 0.0
    %857 = vmatpush1.xpose.msra.mxu0 %v581
    %858 = vmatprep.subr.mxu0 0.0
    %859 = vmatpush2.xpose.msra.mxu0 0.0
    %860 = vmatprep.subr.mxu0 0.0
    %861 = vmatpush2.xpose.msra.mxu0 0.0
    %862 = vmatprep.subr.mxu0 0.0
    %863 = vmatpush2.xpose.msra.mxu0 0.0
    %864 = vmatprep.subr.mxu0 0.0
    %865 = vmatpush2.xpose.msra.mxu0 0.0
    %866 = vmatprep.subr.mxu0 0.0
    %867 = vmatpush2.xpose.msra.mxu0 0.0
    %868 = vmatprep.subr.mxu0 0.0
    %869 = vmatpush2.xpose.msra.mxu0 0.0
    %870 = vmatprep.subr.mxu0 0.0
    %871 = vmatpush2.xpose.msra.mxu0 0.0
    %872 = vmatprep.subr.mxu0 0.0
    %873 = vmatpush2.xpose.msra.mxu0 0.0
    %874 = vmatprep.subr.mxu0 0.0
    %875 = vmatpush2.xpose.msra.mxu0 0.0
    %876 = vmatprep.subr.mxu0 0.0
    %877 = vmatpush2.xpose.msra.mxu0 0.0
    %878 = vmatprep.subr.mxu0 0.0
    %879 = vmatpush2.xpose.msra.mxu0 0.0
    %880 = vmatprep.subr.mxu0 0.0
    %881 = vmatpush2.xpose.msra.mxu0 0.0
    %882 = vmatprep.subr.mxu0 0.0
    %883 = vmatpush2.xpose.msra.mxu0 0.0
    %884 = vmatprep.subr.mxu0 0.0
    %885 = vmatpush2.xpose.msra.mxu0 0.0
    %886 = vmatprep.subr.mxu0 0.0
    %887 = vmatpush2.xpose.msra.mxu0 0.0
    %888 = vmatprep.subr.mxu0 0.0
    %889 = vmatpush2.xpose.msra.mxu0 0.0
    %890 = vmatprep.mubr.f32.mxu0 0.0
    %891 = vmatmul.mubr.f32.gmra.mxu0 %v684
    %v892 = vpop.f32.mrf.mxu0
    %v893 = vadd.f32 %v412, %v892
    %v894 = vpop.f32.mrf.mxu0
    %895 = vdwg.mxu0
    %v897 = vrot.slane %v753, 7
    %v899 = vadd.f32 %v213, %v897
    %v900 = vxor.u32 %v899, 2147483648
    %v901 = vmul.f32 %v900, 1.442695
    %v902 = vpow.pop %v901
    %v903 = vadd.f32 %v902, 1.0
    %v904 = vrcp.pop %v903
    %v905 = vmul.f32 1.0, %v904
    %v907 = vrot.slane %v823, 7
    %v909 = vadd.f32 %v304, %v907
    %v910 = vxor.u32 %v909, 2147483648
    %v911 = vmul.f32 %v910, 1.442695
    %v912 = vpow.pop %v911
    %v913 = vadd.f32 %v912, 1.0
    %v914 = vrcp.pop %v913
    %v915 = vmul.f32 1.0, %v914
    %v917 = vrot.slane %v893, 7
    %v919 = vmul.f32 %v905, %v917
    %v920 = vadd.f32 %v395, %v919
    %v921 = vtanh.pop %v920
    %v922 = vsub.f32 1.0, %v915
    %v923 = vmul.f32 %v922, %v921
    %v924 = vrot.slane %v682, 7
    %v926 = vmul.f32 %v915, %v924
    %v927 = vadd.f32 %v923, %v926
    %v929 = vrot.slane %v927, 1
    %v930 = vsel %vm130, %v929, 0
    %932 = vmatprep.subr.mxu0 0.0
    %933 = vmatpush1.xpose.msra.mxu0 0.0
    %934 = vmatprep.subr.mxu0 0.0
    %935 = vmatpush1.xpose.msra.mxu0 0.0
    %936 = vmatprep.subr.mxu0 0.0
    %937 = vmatpush1.xpose.msra.mxu0 0.0
    %938 = vmatprep.subr.mxu0 0.0
    %939 = vmatpush1.xpose.msra.mxu0 0.0
    %940 = vmatprep.subr.mxu0 0.0
    %941 = vmatpush1.xpose.msra.mxu0 0.0
    %942 = vmatprep.subr.mxu0 0.0
    %943 = vmatpush1.xpose.msra.mxu0 0.0
    %944 = vmatprep.subr.mxu0 0.0
    %945 = vmatpush1.xpose.msra.mxu0 0.0
    %946 = vmatprep.subr.mxu0 0.0
    %947 = vmatpush1.xpose.msra.mxu0 0.0
    %948 = vmatprep.subr.mxu0 0.0
    %949 = vmatpush1.xpose.msra.mxu0 0.0
    %950 = vmatprep.subr.mxu0 0.0
    %951 = vmatpush1.xpose.msra.mxu0 0.0
    %952 = vmatprep.subr.mxu0 0.0
    %953 = vmatpush1.xpose.msra.mxu0 0.0
    %954 = vmatprep.subr.mxu0 0.0
    %955 = vmatpush1.xpose.msra.mxu0 0.0
    %956 = vmatprep.subr.mxu0 0.0
    %957 = vmatpush1.xpose.msra.mxu0 %v426
    %958 = vmatprep.subr.mxu0 0.0
    %959 = vmatpush1.xpose.msra.mxu0 %v423
    %960 = vmatprep.subr.mxu0 0.0
    %961 = vmatpush1.xpose.msra.mxu0 %v420
    %962 = vmatprep.subr.mxu0 0.0
    %963 = vmatpush1.xpose.msra.mxu0 %v417
    %964 = vmatprep.subr.mxu0 0.0
    %965 = vmatpush2.xpose.msra.mxu0 0.0
    %966 = vmatprep.subr.mxu0 0.0
    %967 = vmatpush2.xpose.msra.mxu0 0.0
    %968 = vmatprep.subr.mxu0 0.0
    %969 = vmatpush2.xpose.msra.mxu0 0.0
    %970 = vmatprep.subr.mxu0 0.0
    %971 = vmatpush2.xpose.msra.mxu0 0.0
    %972 = vmatprep.subr.mxu0 0.0
    %973 = vmatpush2.xpose.msra.mxu0 0.0
    %974 = vmatprep.subr.mxu0 0.0
    %975 = vmatpush2.xpose.msra.mxu0 0.0
    %976 = vmatprep.subr.mxu0 0.0
    %977 = vmatpush2.xpose.msra.mxu0 0.0
    %978 = vmatprep.subr.mxu0 0.0
    %979 = vmatpush2.xpose.msra.mxu0 0.0
    %980 = vmatprep.subr.mxu0 0.0
    %981 = vmatpush2.xpose.msra.mxu0 0.0
    %982 = vmatprep.subr.mxu0 0.0
    %983 = vmatpush2.xpose.msra.mxu0 0.0
    %984 = vmatprep.subr.mxu0 0.0
    %985 = vmatpush2.xpose.msra.mxu0 0.0
    %986 = vmatprep.subr.mxu0 0.0
    %987 = vmatpush2.xpose.msra.mxu0 0.0
    %988 = vmatprep.subr.mxu0 0.0
    %989 = vmatpush2.xpose.msra.mxu0 0.0
    %990 = vmatprep.subr.mxu0 0.0
    %991 = vmatpush2.xpose.msra.mxu0 0.0
    %992 = vmatprep.subr.mxu0 0.0
    %993 = vmatpush2.xpose.msra.mxu0 0.0
    %994 = vmatprep.subr.mxu0 0.0
    %995 = vmatpush2.xpose.msra.mxu0 0.0
    %996 = vmatprep.mubr.f32.mxu0 0.0
    %997 = vmatmul.mubr.f32.gmra.mxu0 %v930
    %v998 = vpop.f32.mrf.mxu0
    %v999 = vadd.f32 %v410, %v998
    %v1000 = vpop.f32.mrf.mxu0
    %1001 = vdwg.mxu0
    %1002 = vmatprep.subr.mxu0 0.0
    %1003 = vmatpush1.xpose.msra.mxu0 0.0
    %1004 = vmatprep.subr.mxu0 0.0
    %1005 = vmatpush1.xpose.msra.mxu0 0.0
    %1006 = vmatprep.subr.mxu0 0.0
    %1007 = vmatpush1.xpose.msra.mxu0 0.0
    %1008 = vmatprep.subr.mxu0 0.0
    %1009 = vmatpush1.xpose.msra.mxu0 0.0
    %1010 = vmatprep.subr.mxu0 0.0
    %1011 = vmatpush1.xpose.msra.mxu0 0.0
    %1012 = vmatprep.subr.mxu0 0.0
    %1013 = vmatpush1.xpose.msra.mxu0 0.0
    %1014 = vmatprep.subr.mxu0 0.0
    %1015 = vmatpush1.xpose.msra.mxu0 0.0
    %1016 = vmatprep.subr.mxu0 0.0
    %1017 = vmatpush1.xpose.msra.mxu0 0.0
    %1018 = vmatprep.subr.mxu0 0.0
    %1019 = vmatpush1.xpose.msra.mxu0 0.0
    %1020 = vmatprep.subr.mxu0 0.0
    %1021 = vmatpush1.xpose.msra.mxu0 0.0
    %1022 = vmatprep.subr.mxu0 0.0
    %1023 = vmatpush1.xpose.msra.mxu0 0.0
    %1024 = vmatprep.subr.mxu0 0.0
    %1025 = vmatpush1.xpose.msra.mxu0 0.0
    %1026 = vmatprep.subr.mxu0 0.0
    %1027 = vmatpush1.xpose.msra.mxu0 %v508
    %1028 = vmatprep.subr.mxu0 0.0
    %1029 = vmatpush1.xpose.msra.mxu0 %v505
    %1030 = vmatprep.subr.mxu0 0.0
    %1031 = vmatpush1.xpose.msra.mxu0 %v502
    %1032 = vmatprep.subr.mxu0 0.0
    %1033 = vmatpush1.xpose.msra.mxu0 %v499
    %1034 = vmatprep.subr.mxu0 0.0
    %1035 = vmatpush2.xpose.msra.mxu0 0.0
    %1036 = vmatprep.subr.mxu0 0.0
    %1037 = vmatpush2.xpose.msra.mxu0 0.0
    %1038 = vmatprep.subr.mxu0 0.0
    %1039 = vmatpush2.xpose.msra.mxu0 0.0
    %1040 = vmatprep.subr.mxu0 0.0
    %1041 = vmatpush2.xpose.msra.mxu0 0.0
    %1042 = vmatprep.subr.mxu0 0.0
    %1043 = vmatpush2.xpose.msra.mxu0 0.0
    %1044 = vmatprep.subr.mxu0 0.0
    %1045 = vmatpush2.xpose.msra.mxu0 0.0
    %1046 = vmatprep.subr.mxu0 0.0
    %1047 = vmatpush2.xpose.msra.mxu0 0.0
    %1048 = vmatprep.subr.mxu0 0.0
    %1049 = vmatpush2.xpose.msra.mxu0 0.0
    %1050 = vmatprep.subr.mxu0 0.0
    %1051 = vmatpush2.xpose.msra.mxu0 0.0
    %1052 = vmatprep.subr.mxu0 0.0
    %1053 = vmatpush2.xpose.msra.mxu0 0.0
    %1054 = vmatprep.subr.mxu0 0.0
    %1055 = vmatpush2.xpose.msra.mxu0 0.0
    %1056 = vmatprep.subr.mxu0 0.0
    %1057 = vmatpush2.xpose.msra.mxu0 0.0
    %1058 = vmatprep.subr.mxu0 0.0
    %1059 = vmatpush2.xpose.msra.mxu0 0.0
    %1060 = vmatprep.subr.mxu0 0.0
    %1061 = vmatpush2.xpose.msra.mxu0 0.0
    %1062 = vmatprep.subr.mxu0 0.0
    %1063 = vmatpush2.xpose.msra.mxu0 0.0
    %1064 = vmatprep.subr.mxu0 0.0
    %1065 = vmatpush2.xpose.msra.mxu0 0.0
    %1066 = vmatprep.mubr.f32.mxu0 0.0
    %1067 = vmatmul.mubr.f32.gmra.mxu0 %v930
    %v1068 = vpop.f32.mrf.mxu0
    %v1069 = vadd.f32 %v411, %v1068
    %v1070 = vpop.f32.mrf.mxu0
    %1071 = vdwg.mxu0
    %1072 = vmatprep.subr.mxu0 0.0
    %1073 = vmatpush1.xpose.msra.mxu0 0.0
    %1074 = vmatprep.subr.mxu0 0.0
    %1075 = vmatpush1.xpose.msra.mxu0 0.0
    %1076 = vmatprep.subr.mxu0 0.0
    %1077 = vmatpush1.xpose.msra.mxu0 0.0
    %1078 = vmatprep.subr.mxu0 0.0
    %1079 = vmatpush1.xpose.msra.mxu0 0.0
    %1080 = vmatprep.subr.mxu0 0.0
    %1081 = vmatpush1.xpose.msra.mxu0 0.0
    %1082 = vmatprep.subr.mxu0 0.0
    %1083 = vmatpush1.xpose.msra.mxu0 0.0
    %1084 = vmatprep.subr.mxu0 0.0
    %1085 = vmatpush1.xpose.msra.mxu0 0.0
    %1086 = vmatprep.subr.mxu0 0.0
    %1087 = vmatpush1.xpose.msra.mxu0 0.0
    %1088 = vmatprep.subr.mxu0 0.0
    %1089 = vmatpush1.xpose.msra.mxu0 0.0
    %1090 = vmatprep.subr.mxu0 0.0
    %1091 = vmatpush1.xpose.msra.mxu0 0.0
    %1092 = vmatprep.subr.mxu0 0.0
    %1093 = vmatpush1.xpose.msra.mxu0 0.0
    %1094 = vmatprep.subr.mxu0 0.0
    %1095 = vmatpush1.xpose.msra.mxu0 0.0
    %1096 = vmatprep.subr.mxu0 0.0
    %1097 = vmatpush1.xpose.msra.mxu0 %v590
    %1098 = vmatprep.subr.mxu0 0.0
    %1099 = vmatpush1.xpose.msra.mxu0 %v587
    %1100 = vmatprep.subr.mxu0 0.0
    %1101 = vmatpush1.xpose.msra.mxu0 %v584
    %1102 = vmatprep.subr.mxu0 0.0
    %1103 = vmatpush1.xpose.msra.mxu0 %v581
    %1104 = vmatprep.subr.mxu0 0.0
    %1105 = vmatpush2.xpose.msra.mxu0 0.0
    %1106 = vmatprep.subr.mxu0 0.0
    %1107 = vmatpush2.xpose.msra.mxu0 0.0
    %1108 = vmatprep.subr.mxu0 0.0
    %1109 = vmatpush2.xpose.msra.mxu0 0.0
    %1110 = vmatprep.subr.mxu0 0.0
    %1111 = vmatpush2.xpose.msra.mxu0 0.0
    %1112 = vmatprep.subr.mxu0 0.0
    %1113 = vmatpush2.xpose.msra.mxu0 0.0
    %1114 = vmatprep.subr.mxu0 0.0
    %1115 = vmatpush2.xpose.msra.mxu0 0.0
    %1116 = vmatprep.subr.mxu0 0.0
    %1117 = vmatpush2.xpose.msra.mxu0 0.0
    %1118 = vmatprep.subr.mxu0 0.0
    %1119 = vmatpush2.xpose.msra.mxu0 0.0
    %1120 = vmatprep.subr.mxu0 0.0
    %1121 = vmatpush2.xpose.msra.mxu0 0.0
    %1122 = vmatprep.subr.mxu0 0.0
    %1123 = vmatpush2.xpose.msra.mxu0 0.0
    %1124 = vmatprep.subr.mxu0 0.0
    %1125 = vmatpush2.xpose.msra.mxu0 0.0
    %1126 = vmatprep.subr.mxu0 0.0
    %1127 = vmatpush2.xpose.msra.mxu0 0.0
    %1128 = vmatprep.subr.mxu0 0.0
    %1129 = vmatpush2.xpose.msra.mxu0 0.0
    %1130 = vmatprep.subr.mxu0 0.0
    %1131 = vmatpush2.xpose.msra.mxu0 0.0
    %1132 = vmatprep.subr.mxu0 0.0
    %1133 = vmatpush2.xpose.msra.mxu0 0.0
    %1134 = vmatprep.subr.mxu0 0.0
    %1135 = vmatpush2.xpose.msra.mxu0 0.0
    %1136 = vmatprep.mubr.f32.mxu0 0.0
    %1137 = vmatmul.mubr.f32.gmra.mxu0 %v930
    %v1138 = vpop.f32.mrf.mxu0
    %v1139 = vadd.f32 %v412, %v1138
    %v1140 = vpop.f32.mrf.mxu0
    %1141 = vdwg.mxu0
    %v1143 = vrot.slane %v999, 6
    %v1145 = vadd.f32 %v213, %v1143
    %v1146 = vxor.u32 %v1145, 2147483648
    %v1147 = vmul.f32 %v1146, 1.442695
    %v1148 = vpow.pop %v1147
    %v1149 = vadd.f32 %v1148, 1.0
    %v1150 = vrcp.pop %v1149
    %v1151 = vmul.f32 1.0, %v1150
    %v1153 = vrot.slane %v1069, 6
    %v1155 = vadd.f32 %v304, %v1153
    %v1156 = vxor.u32 %v1155, 2147483648
    %v1157 = vmul.f32 %v1156, 1.442695
    %v1158 = vpow.pop %v1157
    %v1159 = vadd.f32 %v1158, 1.0
    %v1160 = vrcp.pop %v1159
    %v1161 = vmul.f32 1.0, %v1160
    %v1163 = vrot.slane %v1139, 6
    %v1165 = vmul.f32 %v1151, %v1163
    %v1166 = vadd.f32 %v395, %v1165
    %v1167 = vtanh.pop %v1166
    %v1168 = vsub.f32 1.0, %v1161
    %v1169 = vmul.f32 %v1168, %v1167
    %v1170 = vrot.slane %v927, 7
    %v1172 = vmul.f32 %v1161, %v1170
    %v1173 = vadd.f32 %v1169, %v1172
    %v1175 = vrot.slane %v1173, 2
    %v1176 = vsel %vm130, %v1175, 0
    %1178 = vmatprep.subr.mxu0 0.0
    %1179 = vmatpush1.xpose.msra.mxu0 0.0
    %1180 = vmatprep.subr.mxu0 0.0
    %1181 = vmatpush1.xpose.msra.mxu0 0.0
    %1182 = vmatprep.subr.mxu0 0.0
    %1183 = vmatpush1.xpose.msra.mxu0 0.0
    %1184 = vmatprep.subr.mxu0 0.0
    %1185 = vmatpush1.xpose.msra.mxu0 0.0
    %1186 = vmatprep.subr.mxu0 0.0
    %1187 = vmatpush1.xpose.msra.mxu0 0.0
    %1188 = vmatprep.subr.mxu0 0.0
    %1189 = vmatpush1.xpose.msra.mxu0 0.0
    %1190 = vmatprep.subr.mxu0 0.0
    %1191 = vmatpush1.xpose.msra.mxu0 0.0
    %1192 = vmatprep.subr.mxu0 0.0
    %1193 = vmatpush1.xpose.msra.mxu0 0.0
    %1194 = vmatprep.subr.mxu0 0.0
    %1195 = vmatpush1.xpose.msra.mxu0 0.0
    %1196 = vmatprep.subr.mxu0 0.0
    %1197 = vmatpush1.xpose.msra.mxu0 0.0
    %1198 = vmatprep.subr.mxu0 0.0
    %1199 = vmatpush1.xpose.msra.mxu0 0.0
    %1200 = vmatprep.subr.mxu0 0.0
    %1201 = vmatpush1.xpose.msra.mxu0 0.0
    %1202 = vmatprep.subr.mxu0 0.0
    %1203 = vmatpush1.xpose.msra.mxu0 %v426
    %1204 = vmatprep.subr.mxu0 0.0
    %1205 = vmatpush1.xpose.msra.mxu0 %v423
    %1206 = vmatprep.subr.mxu0 0.0
    %1207 = vmatpush1.xpose.msra.mxu0 %v420
    %1208 = vmatprep.subr.mxu0 0.0
    %1209 = vmatpush1.xpose.msra.mxu0 %v417
    %1210 = vmatprep.subr.mxu0 0.0
    %1211 = vmatpush2.xpose.msra.mxu0 0.0
    %1212 = vmatprep.subr.mxu0 0.0
    %1213 = vmatpush2.xpose.msra.mxu0 0.0
    %1214 = vmatprep.subr.mxu0 0.0
    %1215 = vmatpush2.xpose.msra.mxu0 0.0
    %1216 = vmatprep.subr.mxu0 0.0
    %1217 = vmatpush2.xpose.msra.mxu0 0.0
    %1218 = vmatprep.subr.mxu0 0.0
    %1219 = vmatpush2.xpose.msra.mxu0 0.0
    %1220 = vmatprep.subr.mxu0 0.0
    %1221 = vmatpush2.xpose.msra.mxu0 0.0
    %1222 = vmatprep.subr.mxu0 0.0
    %1223 = vmatpush2.xpose.msra.mxu0 0.0
    %1224 = vmatprep.subr.mxu0 0.0
    %1225 = vmatpush2.xpose.msra.mxu0 0.0
    %1226 = vmatprep.subr.mxu0 0.0
    %1227 = vmatpush2.xpose.msra.mxu0 0.0
    %1228 = vmatprep.subr.mxu0 0.0
    %1229 = vmatpush2.xpose.msra.mxu0 0.0
    %1230 = vmatprep.subr.mxu0 0.0
    %1231 = vmatpush2.xpose.msra.mxu0 0.0
    %1232 = vmatprep.subr.mxu0 0.0
    %1233 = vmatpush2.xpose.msra.mxu0 0.0
    %1234 = vmatprep.subr.mxu0 0.0
    %1235 = vmatpush2.xpose.msra.mxu0 0.0
    %1236 = vmatprep.subr.mxu0 0.0
    %1237 = vmatpush2.xpose.msra.mxu0 0.0
    %1238 = vmatprep.subr.mxu0 0.0
    %1239 = vmatpush2.xpose.msra.mxu0 0.0
    %1240 = vmatprep.subr.mxu0 0.0
    %1241 = vmatpush2.xpose.msra.mxu0 0.0
    %1242 = vmatprep.mubr.f32.mxu0 0.0
    %1243 = vmatmul.mubr.f32.gmra.mxu0 %v1176
    %v1244 = vpop.f32.mrf.mxu0
    %v1245 = vadd.f32 %v410, %v1244
    %v1246 = vpop.f32.mrf.mxu0
    %1247 = vdwg.mxu0
    %1248 = vmatprep.subr.mxu0 0.0
    %1249 = vmatpush1.xpose.msra.mxu0 0.0
    %1250 = vmatprep.subr.mxu0 0.0
    %1251 = vmatpush1.xpose.msra.mxu0 0.0
    %1252 = vmatprep.subr.mxu0 0.0
    %1253 = vmatpush1.xpose.msra.mxu0 0.0
    %1254 = vmatprep.subr.mxu0 0.0
    %1255 = vmatpush1.xpose.msra.mxu0 0.0
    %1256 = vmatprep.subr.mxu0 0.0
    %1257 = vmatpush1.xpose.msra.mxu0 0.0
    %1258 = vmatprep.subr.mxu0 0.0
    %1259 = vmatpush1.xpose.msra.mxu0 0.0
    %1260 = vmatprep.subr.mxu0 0.0
    %1261 = vmatpush1.xpose.msra.mxu0 0.0
    %1262 = vmatprep.subr.mxu0 0.0
    %1263 = vmatpush1.xpose.msra.mxu0 0.0
    %1264 = vmatprep.subr.mxu0 0.0
    %1265 = vmatpush1.xpose.msra.mxu0 0.0
    %1266 = vmatprep.subr.mxu0 0.0
    %1267 = vmatpush1.xpose.msra.mxu0 0.0
    %1268 = vmatprep.subr.mxu0 0.0
    %1269 = vmatpush1.xpose.msra.mxu0 0.0
    %1270 = vmatprep.subr.mxu0 0.0
    %1271 = vmatpush1.xpose.msra.mxu0 0.0
    %1272 = vmatprep.subr.mxu0 0.0
    %1273 = vmatpush1.xpose.msra.mxu0 %v508
    %1274 = vmatprep.subr.mxu0 0.0
    %1275 = vmatpush1.xpose.msra.mxu0 %v505
    %1276 = vmatprep.subr.mxu0 0.0
    %1277 = vmatpush1.xpose.msra.mxu0 %v502
    %1278 = vmatprep.subr.mxu0 0.0
    %1279 = vmatpush1.xpose.msra.mxu0 %v499
    %1280 = vmatprep.subr.mxu0 0.0
    %1281 = vmatpush2.xpose.msra.mxu0 0.0
    %1282 = vmatprep.subr.mxu0 0.0
    %1283 = vmatpush2.xpose.msra.mxu0 0.0
    %1284 = vmatprep.subr.mxu0 0.0
    %1285 = vmatpush2.xpose.msra.mxu0 0.0
    %1286 = vmatprep.subr.mxu0 0.0
    %1287 = vmatpush2.xpose.msra.mxu0 0.0
    %1288 = vmatprep.subr.mxu0 0.0
    %1289 = vmatpush2.xpose.msra.mxu0 0.0
    %1290 = vmatprep.subr.mxu0 0.0
    %1291 = vmatpush2.xpose.msra.mxu0 0.0
    %1292 = vmatprep.subr.mxu0 0.0
    %1293 = vmatpush2.xpose.msra.mxu0 0.0
    %1294 = vmatprep.subr.mxu0 0.0
    %1295 = vmatpush2.xpose.msra.mxu0 0.0
    %1296 = vmatprep.subr.mxu0 0.0
    %1297 = vmatpush2.xpose.msra.mxu0 0.0
    %1298 = vmatprep.subr.mxu0 0.0
    %1299 = vmatpush2.xpose.msra.mxu0 0.0
    %1300 = vmatprep.subr.mxu0 0.0
    %1301 = vmatpush2.xpose.msra.mxu0 0.0
    %1302 = vmatprep.subr.mxu0 0.0
    %1303 = vmatpush2.xpose.msra.mxu0 0.0
    %1304 = vmatprep.subr.mxu0 0.0
    %1305 = vmatpush2.xpose.msra.mxu0 0.0
    %1306 = vmatprep.subr.mxu0 0.0
    %1307 = vmatpush2.xpose.msra.mxu0 0.0
    %1308 = vmatprep.subr.mxu0 0.0
    %1309 = vmatpush2.xpose.msra.mxu0 0.0
    %1310 = vmatprep.subr.mxu0 0.0
    %1311 = vmatpush2.xpose.msra.mxu0 0.0
    %1312 = vmatprep.mubr.f32.mxu0 0.0
    %1313 = vmatmul.mubr.f32.gmra.mxu0 %v1176
    %v1314 = vpop.f32.mrf.mxu0
    %v1315 = vadd.f32 %v411, %v1314
    %v1316 = vpop.f32.mrf.mxu0
    %1317 = vdwg.mxu0
    %1318 = vmatprep.subr.mxu0 0.0
    %1319 = vmatpush1.xpose.msra.mxu0 0.0
    %1320 = vmatprep.subr.mxu0 0.0
    %1321 = vmatpush1.xpose.msra.mxu0 0.0
    %1322 = vmatprep.subr.mxu0 0.0
    %1323 = vmatpush1.xpose.msra.mxu0 0.0
    %1324 = vmatprep.subr.mxu0 0.0
    %1325 = vmatpush1.xpose.msra.mxu0 0.0
    %1326 = vmatprep.subr.mxu0 0.0
    %1327 = vmatpush1.xpose.msra.mxu0 0.0
    %1328 = vmatprep.subr.mxu0 0.0
    %1329 = vmatpush1.xpose.msra.mxu0 0.0
    %1330 = vmatprep.subr.mxu0 0.0
    %1331 = vmatpush1.xpose.msra.mxu0 0.0
    %1332 = vmatprep.subr.mxu0 0.0
    %1333 = vmatpush1.xpose.msra.mxu0 0.0
    %1334 = vmatprep.subr.mxu0 0.0
    %1335 = vmatpush1.xpose.msra.mxu0 0.0
    %1336 = vmatprep.subr.mxu0 0.0
    %1337 = vmatpush1.xpose.msra.mxu0 0.0
    %1338 = vmatprep.subr.mxu0 0.0
    %1339 = vmatpush1.xpose.msra.mxu0 0.0
    %1340 = vmatprep.subr.mxu0 0.0
    %1341 = vmatpush1.xpose.msra.mxu0 0.0
    %1342 = vmatprep.subr.mxu0 0.0
    %1343 = vmatpush1.xpose.msra.mxu0 %v590
    %1344 = vmatprep.subr.mxu0 0.0
    %1345 = vmatpush1.xpose.msra.mxu0 %v587
    %1346 = vmatprep.subr.mxu0 0.0
    %1347 = vmatpush1.xpose.msra.mxu0 %v584
    %1348 = vmatprep.subr.mxu0 0.0
    %1349 = vmatpush1.xpose.msra.mxu0 %v581
    %1350 = vmatprep.subr.mxu0 0.0
    %1351 = vmatpush2.xpose.msra.mxu0 0.0
    %1352 = vmatprep.subr.mxu0 0.0
    %1353 = vmatpush2.xpose.msra.mxu0 0.0
    %1354 = vmatprep.subr.mxu0 0.0
    %1355 = vmatpush2.xpose.msra.mxu0 0.0
    %1356 = vmatprep.subr.mxu0 0.0
    %1357 = vmatpush2.xpose.msra.mxu0 0.0
    %1358 = vmatprep.subr.mxu0 0.0
    %1359 = vmatpush2.xpose.msra.mxu0 0.0
    %1360 = vmatprep.subr.mxu0 0.0
    %1361 = vmatpush2.xpose.msra.mxu0 0.0
    %1362 = vmatprep.subr.mxu0 0.0
    %1363 = vmatpush2.xpose.msra.mxu0 0.0
    %1364 = vmatprep.subr.mxu0 0.0
    %1365 = vmatpush2.xpose.msra.mxu0 0.0
    %1366 = vmatprep.subr.mxu0 0.0
    %1367 = vmatpush2.xpose.msra.mxu0 0.0
    %1368 = vmatprep.subr.mxu0 0.0
    %1369 = vmatpush2.xpose.msra.mxu0 0.0
    %1370 = vmatprep.subr.mxu0 0.0
    %1371 = vmatpush2.xpose.msra.mxu0 0.0
    %1372 = vmatprep.subr.mxu0 0.0
    %1373 = vmatpush2.xpose.msra.mxu0 0.0
    %1374 = vmatprep.subr.mxu0 0.0
    %1375 = vmatpush2.xpose.msra.mxu0 0.0
    %1376 = vmatprep.subr.mxu0 0.0
    %1377 = vmatpush2.xpose.msra.mxu0 0.0
    %1378 = vmatprep.subr.mxu0 0.0
    %1379 = vmatpush2.xpose.msra.mxu0 0.0
    %1380 = vmatprep.subr.mxu0 0.0
    %1381 = vmatpush2.xpose.msra.mxu0 0.0
    %1382 = vmatprep.mubr.f32.mxu0 0.0
    %1383 = vmatmul.mubr.f32.gmra.mxu0 %v1176
    %v1384 = vpop.f32.mrf.mxu0
    %v1385 = vadd.f32 %v412, %v1384
    %v1386 = vpop.f32.mrf.mxu0
    %1387 = vdwg.mxu0
    %v1389 = vrot.slane %v1245, 5
    %v1391 = vadd.f32 %v213, %v1389
    %v1392 = vxor.u32 %v1391, 2147483648
    %v1393 = vmul.f32 %v1392, 1.442695
    %v1394 = vpow.pop %v1393
    %v1395 = vadd.f32 %v1394, 1.0
    %v1396 = vrcp.pop %v1395
    %v1397 = vmul.f32 1.0, %v1396
    %v1399 = vrot.slane %v1315, 5
    %v1401 = vadd.f32 %v304, %v1399
    %v1402 = vxor.u32 %v1401, 2147483648
    %v1403 = vmul.f32 %v1402, 1.442695
    %v1404 = vpow.pop %v1403
    %v1405 = vadd.f32 %v1404, 1.0
    %v1406 = vrcp.pop %v1405
    %v1407 = vmul.f32 1.0, %v1406
    %v1409 = vrot.slane %v1385, 5
    %v1411 = vmul.f32 %v1397, %v1409
    %v1412 = vadd.f32 %v395, %v1411
    %v1413 = vtanh.pop %v1412
    %v1414 = vsub.f32 1.0, %v1407
    %v1415 = vmul.f32 %v1414, %v1413
    %v1416 = vrot.slane %v1173, 7
    %v1418 = vmul.f32 %v1407, %v1416
    %v1419 = vadd.f32 %v1415, %v1418
    %v1421 = vrot.slane %v1419, 3
    %v1422 = vsel %vm130, %v1421, 0
    %1424 = vmatprep.subr.mxu0 0.0
    %1425 = vmatpush1.xpose.msra.mxu0 0.0
    %1426 = vmatprep.subr.mxu0 0.0
    %1427 = vmatpush1.xpose.msra.mxu0 0.0
    %1428 = vmatprep.subr.mxu0 0.0
    %1429 = vmatpush1.xpose.msra.mxu0 0.0
    %1430 = vmatprep.subr.mxu0 0.0
    %1431 = vmatpush1.xpose.msra.mxu0 0.0
    %1432 = vmatprep.subr.mxu0 0.0
    %1433 = vmatpush1.xpose.msra.mxu0 0.0
    %1434 = vmatprep.subr.mxu0 0.0
    %1435 = vmatpush1.xpose.msra.mxu0 0.0
    %1436 = vmatprep.subr.mxu0 0.0
    %1437 = vmatpush1.xpose.msra.mxu0 0.0
    %1438 = vmatprep.subr.mxu0 0.0
    %1439 = vmatpush1.xpose.msra.mxu0 0.0
    %1440 = vmatprep.subr.mxu0 0.0
    %1441 = vmatpush1.xpose.msra.mxu0 0.0
    %1442 = vmatprep.subr.mxu0 0.0
    %1443 = vmatpush1.xpose.msra.mxu0 0.0
    %1444 = vmatprep.subr.mxu0 0.0
    %1445 = vmatpush1.xpose.msra.mxu0 0.0
    %1446 = vmatprep.subr.mxu0 0.0
    %1447 = vmatpush1.xpose.msra.mxu0 0.0
    %1448 = vmatprep.subr.mxu0 0.0
    %1449 = vmatpush1.xpose.msra.mxu0 %v426
    %1450 = vmatprep.subr.mxu0 0.0
    %1451 = vmatpush1.xpose.msra.mxu0 %v423
    %1452 = vmatprep.subr.mxu0 0.0
    %1453 = vmatpush1.xpose.msra.mxu0 %v420
    %1454 = vmatprep.subr.mxu0 0.0
    %1455 = vmatpush1.xpose.msra.mxu0 %v417
    %1456 = vmatprep.subr.mxu0 0.0
    %1457 = vmatpush2.xpose.msra.mxu0 0.0
    %1458 = vmatprep.subr.mxu0 0.0
    %1459 = vmatpush2.xpose.msra.mxu0 0.0
    %1460 = vmatprep.subr.mxu0 0.0
    %1461 = vmatpush2.xpose.msra.mxu0 0.0
    %1462 = vmatprep.subr.mxu0 0.0
    %1463 = vmatpush2.xpose.msra.mxu0 0.0
    %1464 = vmatprep.subr.mxu0 0.0
    %1465 = vmatpush2.xpose.msra.mxu0 0.0
    %1466 = vmatprep.subr.mxu0 0.0
    %1467 = vmatpush2.xpose.msra.mxu0 0.0
    %1468 = vmatprep.subr.mxu0 0.0
    %1469 = vmatpush2.xpose.msra.mxu0 0.0
    %1470 = vmatprep.subr.mxu0 0.0
    %1471 = vmatpush2.xpose.msra.mxu0 0.0
    %1472 = vmatprep.subr.mxu0 0.0
    %1473 = vmatpush2.xpose.msra.mxu0 0.0
    %1474 = vmatprep.subr.mxu0 0.0
    %1475 = vmatpush2.xpose.msra.mxu0 0.0
    %1476 = vmatprep.subr.mxu0 0.0
    %1477 = vmatpush2.xpose.msra.mxu0 0.0
    %1478 = vmatprep.subr.mxu0 0.0
    %1479 = vmatpush2.xpose.msra.mxu0 0.0
    %1480 = vmatprep.subr.mxu0 0.0
    %1481 = vmatpush2.xpose.msra.mxu0 0.0
    %1482 = vmatprep.subr.mxu0 0.0
    %1483 = vmatpush2.xpose.msra.mxu0 0.0
    %1484 = vmatprep.subr.mxu0 0.0
    %1485 = vmatpush2.xpose.msra.mxu0 0.0
    %1486 = vmatprep.subr.mxu0 0.0
    %1487 = vmatpush2.xpose.msra.mxu0 0.0
    %1488 = vmatprep.mubr.f32.mxu0 0.0
    %1489 = vmatmul.mubr.f32.gmra.mxu0 %v1422
    %v1490 = vpop.f32.mrf.mxu0
    %v1491 = vadd.f32 %v410, %v1490
    %v1492 = vpop.f32.mrf.mxu0
    %1493 = vdwg.mxu0
    %1494 = vmatprep.subr.mxu0 0.0
    %1495 = vmatpush1.xpose.msra.mxu0 0.0
    %1496 = vmatprep.subr.mxu0 0.0
    %1497 = vmatpush1.xpose.msra.mxu0 0.0
    %1498 = vmatprep.subr.mxu0 0.0
    %1499 = vmatpush1.xpose.msra.mxu0 0.0
    %1500 = vmatprep.subr.mxu0 0.0
    %1501 = vmatpush1.xpose.msra.mxu0 0.0
    %1502 = vmatprep.subr.mxu0 0.0
    %1503 = vmatpush1.xpose.msra.mxu0 0.0
    %1504 = vmatprep.subr.mxu0 0.0
    %1505 = vmatpush1.xpose.msra.mxu0 0.0
    %1506 = vmatprep.subr.mxu0 0.0
    %1507 = vmatpush1.xpose.msra.mxu0 0.0
    %1508 = vmatprep.subr.mxu0 0.0
    %1509 = vmatpush1.xpose.msra.mxu0 0.0
    %1510 = vmatprep.subr.mxu0 0.0
    %1511 = vmatpush1.xpose.msra.mxu0 0.0
    %1512 = vmatprep.subr.mxu0 0.0
    %1513 = vmatpush1.xpose.msra.mxu0 0.0
    %1514 = vmatprep.subr.mxu0 0.0
    %1515 = vmatpush1.xpose.msra.mxu0 0.0
    %1516 = vmatprep.subr.mxu0 0.0
    %1517 = vmatpush1.xpose.msra.mxu0 0.0
    %1518 = vmatprep.subr.mxu0 0.0
    %1519 = vmatpush1.xpose.msra.mxu0 %v508
    %1520 = vmatprep.subr.mxu0 0.0
    %1521 = vmatpush1.xpose.msra.mxu0 %v505
    %1522 = vmatprep.subr.mxu0 0.0
    %1523 = vmatpush1.xpose.msra.mxu0 %v502
    %1524 = vmatprep.subr.mxu0 0.0
    %1525 = vmatpush1.xpose.msra.mxu0 %v499
    %1526 = vmatprep.subr.mxu0 0.0
    %1527 = vmatpush2.xpose.msra.mxu0 0.0
    %1528 = vmatprep.subr.mxu0 0.0
    %1529 = vmatpush2.xpose.msra.mxu0 0.0
    %1530 = vmatprep.subr.mxu0 0.0
    %1531 = vmatpush2.xpose.msra.mxu0 0.0
    %1532 = vmatprep.subr.mxu0 0.0
    %1533 = vmatpush2.xpose.msra.mxu0 0.0
    %1534 = vmatprep.subr.mxu0 0.0
    %1535 = vmatpush2.xpose.msra.mxu0 0.0
    %1536 = vmatprep.subr.mxu0 0.0
    %1537 = vmatpush2.xpose.msra.mxu0 0.0
    %1538 = vmatprep.subr.mxu0 0.0
    %1539 = vmatpush2.xpose.msra.mxu0 0.0
    %1540 = vmatprep.subr.mxu0 0.0
    %1541 = vmatpush2.xpose.msra.mxu0 0.0
    %1542 = vmatprep.subr.mxu0 0.0
    %1543 = vmatpush2.xpose.msra.mxu0 0.0
    %1544 = vmatprep.subr.mxu0 0.0
    %1545 = vmatpush2.xpose.msra.mxu0 0.0
    %1546 = vmatprep.subr.mxu0 0.0
    %1547 = vmatpush2.xpose.msra.mxu0 0.0
    %1548 = vmatprep.subr.mxu0 0.0
    %1549 = vmatpush2.xpose.msra.mxu0 0.0
    %1550 = vmatprep.subr.mxu0 0.0
    %1551 = vmatpush2.xpose.msra.mxu0 0.0
    %1552 = vmatprep.subr.mxu0 0.0
    %1553 = vmatpush2.xpose.msra.mxu0 0.0
    %1554 = vmatprep.subr.mxu0 0.0
    %1555 = vmatpush2.xpose.msra.mxu0 0.0
    %1556 = vmatprep.subr.mxu0 0.0
    %1557 = vmatpush2.xpose.msra.mxu0 0.0
    %1558 = vmatprep.mubr.f32.mxu0 0.0
    %1559 = vmatmul.mubr.f32.gmra.mxu0 %v1422
    %v1560 = vpop.f32.mrf.mxu0
    %v1561 = vadd.f32 %v411, %v1560
    %v1562 = vpop.f32.mrf.mxu0
    %1563 = vdwg.mxu0
    %1564 = vmatprep.subr.mxu0 0.0
    %1565 = vmatpush1.xpose.msra.mxu0 0.0
    %1566 = vmatprep.subr.mxu0 0.0
    %1567 = vmatpush1.xpose.msra.mxu0 0.0
    %1568 = vmatprep.subr.mxu0 0.0
    %1569 = vmatpush1.xpose.msra.mxu0 0.0
    %1570 = vmatprep.subr.mxu0 0.0
    %1571 = vmatpush1.xpose.msra.mxu0 0.0
    %1572 = vmatprep.subr.mxu0 0.0
    %1573 = vmatpush1.xpose.msra.mxu0 0.0
    %1574 = vmatprep.subr.mxu0 0.0
    %1575 = vmatpush1.xpose.msra.mxu0 0.0
    %1576 = vmatprep.subr.mxu0 0.0
    %1577 = vmatpush1.xpose.msra.mxu0 0.0
    %1578 = vmatprep.subr.mxu0 0.0
    %1579 = vmatpush1.xpose.msra.mxu0 0.0
    %1580 = vmatprep.subr.mxu0 0.0
    %1581 = vmatpush1.xpose.msra.mxu0 0.0
    %1582 = vmatprep.subr.mxu0 0.0
    %1583 = vmatpush1.xpose.msra.mxu0 0.0
    %1584 = vmatprep.subr.mxu0 0.0
    %1585 = vmatpush1.xpose.msra.mxu0 0.0
    %1586 = vmatprep.subr.mxu0 0.0
    %1587 = vmatpush1.xpose.msra.mxu0 0.0
    %1588 = vmatprep.subr.mxu0 0.0
    %1589 = vmatpush1.xpose.msra.mxu0 %v590
    %1590 = vmatprep.subr.mxu0 0.0
    %1591 = vmatpush1.xpose.msra.mxu0 %v587
    %1592 = vmatprep.subr.mxu0 0.0
    %1593 = vmatpush1.xpose.msra.mxu0 %v584
    %1594 = vmatprep.subr.mxu0 0.0
    %1595 = vmatpush1.xpose.msra.mxu0 %v581
    %1596 = vmatprep.subr.mxu0 0.0
    %1597 = vmatpush2.xpose.msra.mxu0 0.0
    %1598 = vmatprep.subr.mxu0 0.0
    %1599 = vmatpush2.xpose.msra.mxu0 0.0
    %1600 = vmatprep.subr.mxu0 0.0
    %1601 = vmatpush2.xpose.msra.mxu0 0.0
    %1602 = vmatprep.subr.mxu0 0.0
    %1603 = vmatpush2.xpose.msra.mxu0 0.0
    %1604 = vmatprep.subr.mxu0 0.0
    %1605 = vmatpush2.xpose.msra.mxu0 0.0
    %1606 = vmatprep.subr.mxu0 0.0
    %1607 = vmatpush2.xpose.msra.mxu0 0.0
    %1608 = vmatprep.subr.mxu0 0.0
    %1609 = vmatpush2.xpose.msra.mxu0 0.0
    %1610 = vmatprep.subr.mxu0 0.0
    %1611 = vmatpush2.xpose.msra.mxu0 0.0
    %1612 = vmatprep.subr.mxu0 0.0
    %1613 = vmatpush2.xpose.msra.mxu0 0.0
    %1614 = vmatprep.subr.mxu0 0.0
    %1615 = vmatpush2.xpose.msra.mxu0 0.0
    %1616 = vmatprep.subr.mxu0 0.0
    %1617 = vmatpush2.xpose.msra.mxu0 0.0
    %1618 = vmatprep.subr.mxu0 0.0
    %1619 = vmatpush2.xpose.msra.mxu0 0.0
    %1620 = vmatprep.subr.mxu0 0.0
    %1621 = vmatpush2.xpose.msra.mxu0 0.0
    %1622 = vmatprep.subr.mxu0 0.0
    %1623 = vmatpush2.xpose.msra.mxu0 0.0
    %1624 = vmatprep.subr.mxu0 0.0
    %1625 = vmatpush2.xpose.msra.mxu0 0.0
    %1626 = vmatprep.subr.mxu0 0.0
    %1627 = vmatpush2.xpose.msra.mxu0 0.0
    %1628 = vmatprep.mubr.f32.mxu0 0.0
    %1629 = vmatmul.mubr.f32.gmra.mxu0 %v1422
    %v1630 = vpop.f32.mrf.mxu0
    %v1631 = vadd.f32 %v412, %v1630
    %v1632 = vpop.f32.mrf.mxu0
    %1633 = vdwg.mxu0
    %v1635 = vrot.slane %v1491, 4
    %v1637 = vadd.f32 %v213, %v1635
    %v1638 = vxor.u32 %v1637, 2147483648
    %v1639 = vmul.f32 %v1638, 1.442695
    %v1640 = vpow.pop %v1639
    %v1641 = vadd.f32 %v1640, 1.0
    %v1642 = vrcp.pop %v1641
    %v1643 = vmul.f32 1.0, %v1642
    %v1645 = vrot.slane %v1561, 4
    %v1647 = vadd.f32 %v304, %v1645
    %v1648 = vxor.u32 %v1647, 2147483648
    %v1649 = vmul.f32 %v1648, 1.442695
    %v1650 = vpow.pop %v1649
    %v1651 = vadd.f32 %v1650, 1.0
    %v1652 = vrcp.pop %v1651
    %v1653 = vmul.f32 1.0, %v1652
    %v1655 = vrot.slane %v1631, 4
    %v1657 = vmul.f32 %v1643, %v1655
    %v1658 = vadd.f32 %v395, %v1657
    %v1659 = vtanh.pop %v1658
    %v1660 = vsub.f32 1.0, %v1653
    %v1661 = vmul.f32 %v1660, %v1659
    %v1662 = vrot.slane %v1419, 7
    %v1664 = vmul.f32 %v1653, %v1662
    %v1665 = vadd.f32 %v1661, %v1664
    %v1667 = vrot.slane %v1665, 4
    %v1668 = vsel %vm130, %v1667, 0
    %1670 = vmatprep.subr.mxu0 0.0
    %1671 = vmatpush1.xpose.msra.mxu0 0.0
    %1672 = vmatprep.subr.mxu0 0.0
    %1673 = vmatpush1.xpose.msra.mxu0 0.0
    %1674 = vmatprep.subr.mxu0 0.0
    %1675 = vmatpush1.xpose.msra.mxu0 0.0
    %1676 = vmatprep.subr.mxu0 0.0
    %1677 = vmatpush1.xpose.msra.mxu0 0.0
    %1678 = vmatprep.subr.mxu0 0.0
    %1679 = vmatpush1.xpose.msra.mxu0 0.0
    %1680 = vmatprep.subr.mxu0 0.0
    %1681 = vmatpush1.xpose.msra.mxu0 0.0
    %1682 = vmatprep.subr.mxu0 0.0
    %1683 = vmatpush1.xpose.msra.mxu0 0.0
    %1684 = vmatprep.subr.mxu0 0.0
    %1685 = vmatpush1.xpose.msra.mxu0 0.0
    %1686 = vmatprep.subr.mxu0 0.0
    %1687 = vmatpush1.xpose.msra.mxu0 0.0
    %1688 = vmatprep.subr.mxu0 0.0
    %1689 = vmatpush1.xpose.msra.mxu0 0.0
    %1690 = vmatprep.subr.mxu0 0.0
    %1691 = vmatpush1.xpose.msra.mxu0 0.0
    %1692 = vmatprep.subr.mxu0 0.0
    %1693 = vmatpush1.xpose.msra.mxu0 0.0
    %1694 = vmatprep.subr.mxu0 0.0
    %1695 = vmatpush1.xpose.msra.mxu0 %v426
    %1696 = vmatprep.subr.mxu0 0.0
    %1697 = vmatpush1.xpose.msra.mxu0 %v423
    %1698 = vmatprep.subr.mxu0 0.0
    %1699 = vmatpush1.xpose.msra.mxu0 %v420
    %1700 = vmatprep.subr.mxu0 0.0
    %1701 = vmatpush1.xpose.msra.mxu0 %v417
    %1702 = vmatprep.subr.mxu0 0.0
    %1703 = vmatpush2.xpose.msra.mxu0 0.0
    %1704 = vmatprep.subr.mxu0 0.0
    %1705 = vmatpush2.xpose.msra.mxu0 0.0
    %1706 = vmatprep.subr.mxu0 0.0
    %1707 = vmatpush2.xpose.msra.mxu0 0.0
    %1708 = vmatprep.subr.mxu0 0.0
    %1709 = vmatpush2.xpose.msra.mxu0 0.0
    %1710 = vmatprep.subr.mxu0 0.0
    %1711 = vmatpush2.xpose.msra.mxu0 0.0
    %1712 = vmatprep.subr.mxu0 0.0
    %1713 = vmatpush2.xpose.msra.mxu0 0.0
    %1714 = vmatprep.subr.mxu0 0.0
    %1715 = vmatpush2.xpose.msra.mxu0 0.0
    %1716 = vmatprep.subr.mxu0 0.0
    %1717 = vmatpush2.xpose.msra.mxu0 0.0
    %1718 = vmatprep.subr.mxu0 0.0
    %1719 = vmatpush2.xpose.msra.mxu0 0.0
    %1720 = vmatprep.subr.mxu0 0.0
    %1721 = vmatpush2.xpose.msra.mxu0 0.0
    %1722 = vmatprep.subr.mxu0 0.0
    %1723 = vmatpush2.xpose.msra.mxu0 0.0
    %1724 = vmatprep.subr.mxu0 0.0
    %1725 = vmatpush2.xpose.msra.mxu0 0.0
    %1726 = vmatprep.subr.mxu0 0.0
    %1727 = vmatpush2.xpose.msra.mxu0 0.0
    %1728 = vmatprep.subr.mxu0 0.0
    %1729 = vmatpush2.xpose.msra.mxu0 0.0
    %1730 = vmatprep.subr.mxu0 0.0
    %1731 = vmatpush2.xpose.msra.mxu0 0.0
    %1732 = vmatprep.subr.mxu0 0.0
    %1733 = vmatpush2.xpose.msra.mxu0 0.0
    %1734 = vmatprep.mubr.f32.mxu0 0.0
    %1735 = vmatmul.mubr.f32.gmra.mxu0 %v1668
    %v1736 = vpop.f32.mrf.mxu0
    %v1737 = vadd.f32 %v410, %v1736
    %v1738 = vpop.f32.mrf.mxu0
    %1739 = vdwg.mxu0
    %1740 = vmatprep.subr.mxu0 0.0
    %1741 = vmatpush1.xpose.msra.mxu0 0.0
    %1742 = vmatprep.subr.mxu0 0.0
    %1743 = vmatpush1.xpose.msra.mxu0 0.0
    %1744 = vmatprep.subr.mxu0 0.0
    %1745 = vmatpush1.xpose.msra.mxu0 0.0
    %1746 = vmatprep.subr.mxu0 0.0
    %1747 = vmatpush1.xpose.msra.mxu0 0.0
    %1748 = vmatprep.subr.mxu0 0.0
    %1749 = vmatpush1.xpose.msra.mxu0 0.0
    %1750 = vmatprep.subr.mxu0 0.0
    %1751 = vmatpush1.xpose.msra.mxu0 0.0
    %1752 = vmatprep.subr.mxu0 0.0
    %1753 = vmatpush1.xpose.msra.mxu0 0.0
    %1754 = vmatprep.subr.mxu0 0.0
    %1755 = vmatpush1.xpose.msra.mxu0 0.0
    %1756 = vmatprep.subr.mxu0 0.0
    %1757 = vmatpush1.xpose.msra.mxu0 0.0
    %1758 = vmatprep.subr.mxu0 0.0
    %1759 = vmatpush1.xpose.msra.mxu0 0.0
    %1760 = vmatprep.subr.mxu0 0.0
    %1761 = vmatpush1.xpose.msra.mxu0 0.0
    %1762 = vmatprep.subr.mxu0 0.0
    %1763 = vmatpush1.xpose.msra.mxu0 0.0
    %1764 = vmatprep.subr.mxu0 0.0
    %1765 = vmatpush1.xpose.msra.mxu0 %v508
    %1766 = vmatprep.subr.mxu0 0.0
    %1767 = vmatpush1.xpose.msra.mxu0 %v505
    %1768 = vmatprep.subr.mxu0 0.0
    %1769 = vmatpush1.xpose.msra.mxu0 %v502
    %1770 = vmatprep.subr.mxu0 0.0
    %1771 = vmatpush1.xpose.msra.mxu0 %v499
    %1772 = vmatprep.subr.mxu0 0.0
    %1773 = vmatpush2.xpose.msra.mxu0 0.0
    %1774 = vmatprep.subr.mxu0 0.0
    %1775 = vmatpush2.xpose.msra.mxu0 0.0
    %1776 = vmatprep.subr.mxu0 0.0
    %1777 = vmatpush2.xpose.msra.mxu0 0.0
    %1778 = vmatprep.subr.mxu0 0.0
    %1779 = vmatpush2.xpose.msra.mxu0 0.0
    %1780 = vmatprep.subr.mxu0 0.0
    %1781 = vmatpush2.xpose.msra.mxu0 0.0
    %1782 = vmatprep.subr.mxu0 0.0
    %1783 = vmatpush2.xpose.msra.mxu0 0.0
    %1784 = vmatprep.subr.mxu0 0.0
    %1785 = vmatpush2.xpose.msra.mxu0 0.0
    %1786 = vmatprep.subr.mxu0 0.0
    %1787 = vmatpush2.xpose.msra.mxu0 0.0
    %1788 = vmatprep.subr.mxu0 0.0
    %1789 = vmatpush2.xpose.msra.mxu0 0.0
    %1790 = vmatprep.subr.mxu0 0.0
    %1791 = vmatpush2.xpose.msra.mxu0 0.0
    %1792 = vmatprep.subr.mxu0 0.0
    %1793 = vmatpush2.xpose.msra.mxu0 0.0
    %1794 = vmatprep.subr.mxu0 0.0
    %1795 = vmatpush2.xpose.msra.mxu0 0.0
    %1796 = vmatprep.subr.mxu0 0.0
    %1797 = vmatpush2.xpose.msra.mxu0 0.0
    %1798 = vmatprep.subr.mxu0 0.0
    %1799 = vmatpush2.xpose.msra.mxu0 0.0
    %1800 = vmatprep.subr.mxu0 0.0
    %1801 = vmatpush2.xpose.msra.mxu0 0.0
    %1802 = vmatprep.subr.mxu0 0.0
    %1803 = vmatpush2.xpose.msra.mxu0 0.0
    %1804 = vmatprep.mubr.f32.mxu0 0.0
    %1805 = vmatmul.mubr.f32.gmra.mxu0 %v1668
    %v1806 = vpop.f32.mrf.mxu0
    %v1807 = vadd.f32 %v411, %v1806
    %v1808 = vpop.f32.mrf.mxu0
    %1809 = vdwg.mxu0
    %1810 = vmatprep.subr.mxu0 0.0
    %1811 = vmatpush1.xpose.msra.mxu0 0.0
    %1812 = vmatprep.subr.mxu0 0.0
    %1813 = vmatpush1.xpose.msra.mxu0 0.0
    %1814 = vmatprep.subr.mxu0 0.0
    %1815 = vmatpush1.xpose.msra.mxu0 0.0
    %1816 = vmatprep.subr.mxu0 0.0
    %1817 = vmatpush1.xpose.msra.mxu0 0.0
    %1818 = vmatprep.subr.mxu0 0.0
    %1819 = vmatpush1.xpose.msra.mxu0 0.0
    %1820 = vmatprep.subr.mxu0 0.0
    %1821 = vmatpush1.xpose.msra.mxu0 0.0
    %1822 = vmatprep.subr.mxu0 0.0
    %1823 = vmatpush1.xpose.msra.mxu0 0.0
    %1824 = vmatprep.subr.mxu0 0.0
    %1825 = vmatpush1.xpose.msra.mxu0 0.0
    %1826 = vmatprep.subr.mxu0 0.0
    %1827 = vmatpush1.xpose.msra.mxu0 0.0
    %1828 = vmatprep.subr.mxu0 0.0
    %1829 = vmatpush1.xpose.msra.mxu0 0.0
    %1830 = vmatprep.subr.mxu0 0.0
    %1831 = vmatpush1.xpose.msra.mxu0 0.0
    %1832 = vmatprep.subr.mxu0 0.0
    %1833 = vmatpush1.xpose.msra.mxu0 0.0
    %1834 = vmatprep.subr.mxu0 0.0
    %1835 = vmatpush1.xpose.msra.mxu0 %v590
    %1836 = vmatprep.subr.mxu0 0.0
    %1837 = vmatpush1.xpose.msra.mxu0 %v587
    %1838 = vmatprep.subr.mxu0 0.0
    %1839 = vmatpush1.xpose.msra.mxu0 %v584
    %1840 = vmatprep.subr.mxu0 0.0
    %1841 = vmatpush1.xpose.msra.mxu0 %v581
    %1842 = vmatprep.subr.mxu0 0.0
    %1843 = vmatpush2.xpose.msra.mxu0 0.0
    %1844 = vmatprep.subr.mxu0 0.0
    %1845 = vmatpush2.xpose.msra.mxu0 0.0
    %1846 = vmatprep.subr.mxu0 0.0
    %1847 = vmatpush2.xpose.msra.mxu0 0.0
    %1848 = vmatprep.subr.mxu0 0.0
    %1849 = vmatpush2.xpose.msra.mxu0 0.0
    %1850 = vmatprep.subr.mxu0 0.0
    %1851 = vmatpush2.xpose.msra.mxu0 0.0
    %1852 = vmatprep.subr.mxu0 0.0
    %1853 = vmatpush2.xpose.msra.mxu0 0.0
    %1854 = vmatprep.subr.mxu0 0.0
    %1855 = vmatpush2.xpose.msra.mxu0 0.0
    %1856 = vmatprep.subr.mxu0 0.0
    %1857 = vmatpush2.xpose.msra.mxu0 0.0
    %1858 = vmatprep.subr.mxu0 0.0
    %1859 = vmatpush2.xpose.msra.mxu0 0.0
    %1860 = vmatprep.subr.mxu0 0.0
    %1861 = vmatpush2.xpose.msra.mxu0 0.0
    %1862 = vmatprep.subr.mxu0 0.0
    %1863 = vmatpush2.xpose.msra.mxu0 0.0
    %1864 = vmatprep.subr.mxu0 0.0
    %1865 = vmatpush2.xpose.msra.mxu0 0.0
    %1866 = vmatprep.subr.mxu0 0.0
    %1867 = vmatpush2.xpose.msra.mxu0 0.0
    %1868 = vmatprep.subr.mxu0 0.0
    %1869 = vmatpush2.xpose.msra.mxu0 0.0
    %1870 = vmatprep.subr.mxu0 0.0
    %1871 = vmatpush2.xpose.msra.mxu0 0.0
    %1872 = vmatprep.subr.mxu0 0.0
    %1873 = vmatpush2.xpose.msra.mxu0 0.0
    %1874 = vmatprep.mubr.f32.mxu0 0.0
    %1875 = vmatmul.mubr.f32.gmra.mxu0 %v1668
    %v1876 = vpop.f32.mrf.mxu0
    %v1877 = vadd.f32 %v412, %v1876
    %v1878 = vpop.f32.mrf.mxu0
    %1879 = vdwg.mxu0
    %v1881 = vrot.slane %v1737, 3
    %v1883 = vadd.f32 %v213, %v1881
    %v1884 = vxor.u32 %v1883, 2147483648
    %v1885 = vmul.f32 %v1884, 1.442695
    %v1886 = vpow.pop %v1885
    %v1887 = vadd.f32 %v1886, 1.0
    %v1888 = vrcp.pop %v1887
    %v1889 = vmul.f32 1.0, %v1888
    %v1891 = vrot.slane %v1807, 3
    %v1893 = vadd.f32 %v304, %v1891
    %v1894 = vxor.u32 %v1893, 2147483648
    %v1895 = vmul.f32 %v1894, 1.442695
    %v1896 = vpow.pop %v1895
    %v1897 = vadd.f32 %v1896, 1.0
    %v1898 = vrcp.pop %v1897
    %v1899 = vmul.f32 1.0, %v1898
    %v1901 = vrot.slane %v1877, 3
    %v1903 = vmul.f32 %v1889, %v1901
    %v1904 = vadd.f32 %v395, %v1903
    %v1905 = vtanh.pop %v1904
    %v1906 = vsub.f32 1.0, %v1899
    %v1907 = vmul.f32 %v1906, %v1905
    %v1908 = vrot.slane %v1665, 7
    %v1910 = vmul.f32 %v1899, %v1908
    %v1911 = vadd.f32 %v1907, %v1910
    %v1913 = vrot.slane %v1911, 5
    %v1914 = vsel %vm130, %v1913, 0
    %1916 = vmatprep.subr.mxu0 0.0
    %1917 = vmatpush1.xpose.msra.mxu0 0.0
    %1918 = vmatprep.subr.mxu0 0.0
    %1919 = vmatpush1.xpose.msra.mxu0 0.0
    %1920 = vmatprep.subr.mxu0 0.0
    %1921 = vmatpush1.xpose.msra.mxu0 0.0
    %1922 = vmatprep.subr.mxu0 0.0
    %1923 = vmatpush1.xpose.msra.mxu0 0.0
    %1924 = vmatprep.subr.mxu0 0.0
    %1925 = vmatpush1.xpose.msra.mxu0 0.0
    %1926 = vmatprep.subr.mxu0 0.0
    %1927 = vmatpush1.xpose.msra.mxu0 0.0
    %1928 = vmatprep.subr.mxu0 0.0
    %1929 = vmatpush1.xpose.msra.mxu0 0.0
    %1930 = vmatprep.subr.mxu0 0.0
    %1931 = vmatpush1.xpose.msra.mxu0 0.0
    %1932 = vmatprep.subr.mxu0 0.0
    %1933 = vmatpush1.xpose.msra.mxu0 0.0
    %1934 = vmatprep.subr.mxu0 0.0
    %1935 = vmatpush1.xpose.msra.mxu0 0.0
    %1936 = vmatprep.subr.mxu0 0.0
    %1937 = vmatpush1.xpose.msra.mxu0 0.0
    %1938 = vmatprep.subr.mxu0 0.0
    %1939 = vmatpush1.xpose.msra.mxu0 0.0
    %1940 = vmatprep.subr.mxu0 0.0
    %1941 = vmatpush1.xpose.msra.mxu0 %v426
    %1942 = vmatprep.subr.mxu0 0.0
    %1943 = vmatpush1.xpose.msra.mxu0 %v423
    %1944 = vmatprep.subr.mxu0 0.0
    %1945 = vmatpush1.xpose.msra.mxu0 %v420
    %1946 = vmatprep.subr.mxu0 0.0
    %1947 = vmatpush1.xpose.msra.mxu0 %v417
    %1948 = vmatprep.subr.mxu0 0.0
    %1949 = vmatpush2.xpose.msra.mxu0 0.0
    %1950 = vmatprep.subr.mxu0 0.0
    %1951 = vmatpush2.xpose.msra.mxu0 0.0
    %1952 = vmatprep.subr.mxu0 0.0
    %1953 = vmatpush2.xpose.msra.mxu0 0.0
    %1954 = vmatprep.subr.mxu0 0.0
    %1955 = vmatpush2.xpose.msra.mxu0 0.0
    %1956 = vmatprep.subr.mxu0 0.0
    %1957 = vmatpush2.xpose.msra.mxu0 0.0
    %1958 = vmatprep.subr.mxu0 0.0
    %1959 = vmatpush2.xpose.msra.mxu0 0.0
    %1960 = vmatprep.subr.mxu0 0.0
    %1961 = vmatpush2.xpose.msra.mxu0 0.0
    %1962 = vmatprep.subr.mxu0 0.0
    %1963 = vmatpush2.xpose.msra.mxu0 0.0
    %1964 = vmatprep.subr.mxu0 0.0
    %1965 = vmatpush2.xpose.msra.mxu0 0.0
    %1966 = vmatprep.subr.mxu0 0.0
    %1967 = vmatpush2.xpose.msra.mxu0 0.0
    %1968 = vmatprep.subr.mxu0 0.0
    %1969 = vmatpush2.xpose.msra.mxu0 0.0
    %1970 = vmatprep.subr.mxu0 0.0
    %1971 = vmatpush2.xpose.msra.mxu0 0.0
    %1972 = vmatprep.subr.mxu0 0.0
    %1973 = vmatpush2.xpose.msra.mxu0 0.0
    %1974 = vmatprep.subr.mxu0 0.0
    %1975 = vmatpush2.xpose.msra.mxu0 0.0
    %1976 = vmatprep.subr.mxu0 0.0
    %1977 = vmatpush2.xpose.msra.mxu0 0.0
    %1978 = vmatprep.subr.mxu0 0.0
    %1979 = vmatpush2.xpose.msra.mxu0 0.0
    %1980 = vmatprep.mubr.f32.mxu0 0.0
    %1981 = vmatmul.mubr.f32.gmra.mxu0 %v1914
    %v1982 = vpop.f32.mrf.mxu0
    %v1983 = vadd.f32 %v410, %v1982
    %v1984 = vpop.f32.mrf.mxu0
    %1985 = vdwg.mxu0
    %1986 = vmatprep.subr.mxu0 0.0
    %1987 = vmatpush1.xpose.msra.mxu0 0.0
    %1988 = vmatprep.subr.mxu0 0.0
    %1989 = vmatpush1.xpose.msra.mxu0 0.0
    %1990 = vmatprep.subr.mxu0 0.0
    %1991 = vmatpush1.xpose.msra.mxu0 0.0
    %1992 = vmatprep.subr.mxu0 0.0
    %1993 = vmatpush1.xpose.msra.mxu0 0.0
    %1994 = vmatprep.subr.mxu0 0.0
    %1995 = vmatpush1.xpose.msra.mxu0 0.0
    %1996 = vmatprep.subr.mxu0 0.0
    %1997 = vmatpush1.xpose.msra.mxu0 0.0
    %1998 = vmatprep.subr.mxu0 0.0
    %1999 = vmatpush1.xpose.msra.mxu0 0.0
    %2000 = vmatprep.subr.mxu0 0.0
    %2001 = vmatpush1.xpose.msra.mxu0 0.0
    %2002 = vmatprep.subr.mxu0 0.0
    %2003 = vmatpush1.xpose.msra.mxu0 0.0
    %2004 = vmatprep.subr.mxu0 0.0
    %2005 = vmatpush1.xpose.msra.mxu0 0.0
    %2006 = vmatprep.subr.mxu0 0.0
    %2007 = vmatpush1.xpose.msra.mxu0 0.0
    %2008 = vmatprep.subr.mxu0 0.0
    %2009 = vmatpush1.xpose.msra.mxu0 0.0
    %2010 = vmatprep.subr.mxu0 0.0
    %2011 = vmatpush1.xpose.msra.mxu0 %v508
    %2012 = vmatprep.subr.mxu0 0.0
    %2013 = vmatpush1.xpose.msra.mxu0 %v505
    %2014 = vmatprep.subr.mxu0 0.0
    %2015 = vmatpush1.xpose.msra.mxu0 %v502
    %2016 = vmatprep.subr.mxu0 0.0
    %2017 = vmatpush1.xpose.msra.mxu0 %v499
    %2018 = vmatprep.subr.mxu0 0.0
    %2019 = vmatpush2.xpose.msra.mxu0 0.0
    %2020 = vmatprep.subr.mxu0 0.0
    %2021 = vmatpush2.xpose.msra.mxu0 0.0
    %2022 = vmatprep.subr.mxu0 0.0
    %2023 = vmatpush2.xpose.msra.mxu0 0.0
    %2024 = vmatprep.subr.mxu0 0.0
    %2025 = vmatpush2.xpose.msra.mxu0 0.0
    %2026 = vmatprep.subr.mxu0 0.0
    %2027 = vmatpush2.xpose.msra.mxu0 0.0
    %2028 = vmatprep.subr.mxu0 0.0
    %2029 = vmatpush2.xpose.msra.mxu0 0.0
    %2030 = vmatprep.subr.mxu0 0.0
    %2031 = vmatpush2.xpose.msra.mxu0 0.0
    %2032 = vmatprep.subr.mxu0 0.0
    %2033 = vmatpush2.xpose.msra.mxu0 0.0
    %2034 = vmatprep.subr.mxu0 0.0
    %2035 = vmatpush2.xpose.msra.mxu0 0.0
    %2036 = vmatprep.subr.mxu0 0.0
    %2037 = vmatpush2.xpose.msra.mxu0 0.0
    %2038 = vmatprep.subr.mxu0 0.0
    %2039 = vmatpush2.xpose.msra.mxu0 0.0
    %2040 = vmatprep.subr.mxu0 0.0
    %2041 = vmatpush2.xpose.msra.mxu0 0.0
    %2042 = vmatprep.subr.mxu0 0.0
    %2043 = vmatpush2.xpose.msra.mxu0 0.0
    %2044 = vmatprep.subr.mxu0 0.0
    %2045 = vmatpush2.xpose.msra.mxu0 0.0
    %2046 = vmatprep.subr.mxu0 0.0
    %2047 = vmatpush2.xpose.msra.mxu0 0.0
    %2048 = vmatprep.subr.mxu0 0.0
    %2049 = vmatpush2.xpose.msra.mxu0 0.0
    %2050 = vmatprep.mubr.f32.mxu0 0.0
    %2051 = vmatmul.mubr.f32.gmra.mxu0 %v1914
    %v2052 = vpop.f32.mrf.mxu0
    %v2053 = vadd.f32 %v411, %v2052
    %v2054 = vpop.f32.mrf.mxu0
    %2055 = vdwg.mxu0
    %2056 = vmatprep.subr.mxu0 0.0
    %2057 = vmatpush1.xpose.msra.mxu0 0.0
    %2058 = vmatprep.subr.mxu0 0.0
    %2059 = vmatpush1.xpose.msra.mxu0 0.0
    %2060 = vmatprep.subr.mxu0 0.0
    %2061 = vmatpush1.xpose.msra.mxu0 0.0
    %2062 = vmatprep.subr.mxu0 0.0
    %2063 = vmatpush1.xpose.msra.mxu0 0.0
    %2064 = vmatprep.subr.mxu0 0.0
    %2065 = vmatpush1.xpose.msra.mxu0 0.0
    %2066 = vmatprep.subr.mxu0 0.0
    %2067 = vmatpush1.xpose.msra.mxu0 0.0
    %2068 = vmatprep.subr.mxu0 0.0
    %2069 = vmatpush1.xpose.msra.mxu0 0.0
    %2070 = vmatprep.subr.mxu0 0.0
    %2071 = vmatpush1.xpose.msra.mxu0 0.0
    %2072 = vmatprep.subr.mxu0 0.0
    %2073 = vmatpush1.xpose.msra.mxu0 0.0
    %2074 = vmatprep.subr.mxu0 0.0
    %2075 = vmatpush1.xpose.msra.mxu0 0.0
    %2076 = vmatprep.subr.mxu0 0.0
    %2077 = vmatpush1.xpose.msra.mxu0 0.0
    %2078 = vmatprep.subr.mxu0 0.0
    %2079 = vmatpush1.xpose.msra.mxu0 0.0
    %2080 = vmatprep.subr.mxu0 0.0
    %2081 = vmatpush1.xpose.msra.mxu0 %v590
    %2082 = vmatprep.subr.mxu0 0.0
    %2083 = vmatpush1.xpose.msra.mxu0 %v587
    %2084 = vmatprep.subr.mxu0 0.0
    %2085 = vmatpush1.xpose.msra.mxu0 %v584
    %2086 = vmatprep.subr.mxu0 0.0
    %2087 = vmatpush1.xpose.msra.mxu0 %v581
    %2088 = vmatprep.subr.mxu0 0.0
    %2089 = vmatpush2.xpose.msra.mxu0 0.0
    %2090 = vmatprep.subr.mxu0 0.0
    %2091 = vmatpush2.xpose.msra.mxu0 0.0
    %2092 = vmatprep.subr.mxu0 0.0
    %2093 = vmatpush2.xpose.msra.mxu0 0.0
    %2094 = vmatprep.subr.mxu0 0.0
    %2095 = vmatpush2.xpose.msra.mxu0 0.0
    %2096 = vmatprep.subr.mxu0 0.0
    %2097 = vmatpush2.xpose.msra.mxu0 0.0
    %2098 = vmatprep.subr.mxu0 0.0
    %2099 = vmatpush2.xpose.msra.mxu0 0.0
    %2100 = vmatprep.subr.mxu0 0.0
    %2101 = vmatpush2.xpose.msra.mxu0 0.0
    %2102 = vmatprep.subr.mxu0 0.0
    %2103 = vmatpush2.xpose.msra.mxu0 0.0
    %2104 = vmatprep.subr.mxu0 0.0
    %2105 = vmatpush2.xpose.msra.mxu0 0.0
    %2106 = vmatprep.subr.mxu0 0.0
    %2107 = vmatpush2.xpose.msra.mxu0 0.0
    %2108 = vmatprep.subr.mxu0 0.0
    %2109 = vmatpush2.xpose.msra.mxu0 0.0
    %2110 = vmatprep.subr.mxu0 0.0
    %2111 = vmatpush2.xpose.msra.mxu0 0.0
    %2112 = vmatprep.subr.mxu0 0.0
    %2113 = vmatpush2.xpose.msra.mxu0 0.0
    %2114 = vmatprep.subr.mxu0 0.0
    %2115 = vmatpush2.xpose.msra.mxu0 0.0
    %2116 = vmatprep.subr.mxu0 0.0
    %2117 = vmatpush2.xpose.msra.mxu0 0.0
    %2118 = vmatprep.subr.mxu0 0.0
    %2119 = vmatpush2.xpose.msra.mxu0 0.0
    %2120 = vmatprep.mubr.f32.mxu0 0.0
    %2121 = vmatmul.mubr.f32.gmra.mxu0 %v1914
    %v2122 = vpop.f32.mrf.mxu0
    %v2123 = vadd.f32 %v412, %v2122
    %v2124 = vpop.f32.mrf.mxu0
    %2125 = vdwg.mxu0
    %v2127 = vrot.slane %v1983, 2
    %v2129 = vadd.f32 %v213, %v2127
    %v2130 = vxor.u32 %v2129, 2147483648
    %v2131 = vmul.f32 %v2130, 1.442695
    %v2132 = vpow.pop %v2131
    %v2133 = vadd.f32 %v2132, 1.0
    %v2134 = vrcp.pop %v2133
    %v2135 = vmul.f32 1.0, %v2134
    %v2137 = vrot.slane %v2053, 2
    %v2139 = vadd.f32 %v304, %v2137
    %v2140 = vxor.u32 %v2139, 2147483648
    %v2141 = vmul.f32 %v2140, 1.442695
    %v2142 = vpow.pop %v2141
    %v2143 = vadd.f32 %v2142, 1.0
    %v2144 = vrcp.pop %v2143
    %v2145 = vmul.f32 1.0, %v2144
    %v2147 = vrot.slane %v2123, 2
    %v2149 = vmul.f32 %v2135, %v2147
    %v2150 = vadd.f32 %v395, %v2149
    %v2151 = vtanh.pop %v2150
    %v2152 = vsub.f32 1.0, %v2145
    %v2153 = vmul.f32 %v2152, %v2151
    %v2154 = vrot.slane %v1911, 7
    %v2156 = vmul.f32 %v2145, %v2154
    %v2157 = vadd.f32 %v2153, %v2156
    %v2159 = vrot.slane %v2157, 6
    %v2160 = vsel %vm130, %v2159, 0
    %2162 = vmatprep.subr.mxu0 0.0
    %2163 = vmatpush1.xpose.msra.mxu0 0.0
    %2164 = vmatprep.subr.mxu0 0.0
    %2165 = vmatpush1.xpose.msra.mxu0 0.0
    %2166 = vmatprep.subr.mxu0 0.0
    %2167 = vmatpush1.xpose.msra.mxu0 0.0
    %2168 = vmatprep.subr.mxu0 0.0
    %2169 = vmatpush1.xpose.msra.mxu0 0.0
    %2170 = vmatprep.subr.mxu0 0.0
    %2171 = vmatpush1.xpose.msra.mxu0 0.0
    %2172 = vmatprep.subr.mxu0 0.0
    %2173 = vmatpush1.xpose.msra.mxu0 0.0
    %2174 = vmatprep.subr.mxu0 0.0
    %2175 = vmatpush1.xpose.msra.mxu0 0.0
    %2176 = vmatprep.subr.mxu0 0.0
    %2177 = vmatpush1.xpose.msra.mxu0 0.0
    %2178 = vmatprep.subr.mxu0 0.0
    %2179 = vmatpush1.xpose.msra.mxu0 0.0
    %2180 = vmatprep.subr.mxu0 0.0
    %2181 = vmatpush1.xpose.msra.mxu0 0.0
    %2182 = vmatprep.subr.mxu0 0.0
    %2183 = vmatpush1.xpose.msra.mxu0 0.0
    %2184 = vmatprep.subr.mxu0 0.0
    %2185 = vmatpush1.xpose.msra.mxu0 0.0
    %2186 = vmatprep.subr.mxu0 0.0
    %2187 = vmatpush1.xpose.msra.mxu0 %v426
    %2188 = vmatprep.subr.mxu0 0.0
    %2189 = vmatpush1.xpose.msra.mxu0 %v423
    %2190 = vmatprep.subr.mxu0 0.0
    %2191 = vmatpush1.xpose.msra.mxu0 %v420
    %2192 = vmatprep.subr.mxu0 0.0
    %2193 = vmatpush1.xpose.msra.mxu0 %v417
    %2194 = vmatprep.subr.mxu0 0.0
    %2195 = vmatpush2.xpose.msra.mxu0 0.0
    %2196 = vmatprep.subr.mxu0 0.0
    %2197 = vmatpush2.xpose.msra.mxu0 0.0
    %2198 = vmatprep.subr.mxu0 0.0
    %2199 = vmatpush2.xpose.msra.mxu0 0.0
    %2200 = vmatprep.subr.mxu0 0.0
    %2201 = vmatpush2.xpose.msra.mxu0 0.0
    %2202 = vmatprep.subr.mxu0 0.0
    %2203 = vmatpush2.xpose.msra.mxu0 0.0
    %2204 = vmatprep.subr.mxu0 0.0
    %2205 = vmatpush2.xpose.msra.mxu0 0.0
    %2206 = vmatprep.subr.mxu0 0.0
    %2207 = vmatpush2.xpose.msra.mxu0 0.0
    %2208 = vmatprep.subr.mxu0 0.0
    %2209 = vmatpush2.xpose.msra.mxu0 0.0
    %2210 = vmatprep.subr.mxu0 0.0
    %2211 = vmatpush2.xpose.msra.mxu0 0.0
    %2212 = vmatprep.subr.mxu0 0.0
    %2213 = vmatpush2.xpose.msra.mxu0 0.0
    %2214 = vmatprep.subr.mxu0 0.0
    %2215 = vmatpush2.xpose.msra.mxu0 0.0
    %2216 = vmatprep.subr.mxu0 0.0
    %2217 = vmatpush2.xpose.msra.mxu0 0.0
    %2218 = vmatprep.subr.mxu0 0.0
    %2219 = vmatpush2.xpose.msra.mxu0 0.0
    %2220 = vmatprep.subr.mxu0 0.0
    %2221 = vmatpush2.xpose.msra.mxu0 0.0
    %2222 = vmatprep.subr.mxu0 0.0
    %2223 = vmatpush2.xpose.msra.mxu0 0.0
    %2224 = vmatprep.subr.mxu0 0.0
    %2225 = vmatpush2.xpose.msra.mxu0 0.0
    %2226 = vmatprep.mubr.f32.mxu0 0.0
    %2227 = vmatmul.mubr.f32.gmra.mxu0 %v2160
    %v2228 = vpop.f32.mrf.mxu0
    %v2229 = vadd.f32 %v410, %v2228
    %v2230 = vpop.f32.mrf.mxu0
    %2231 = vdwg.mxu0
    %2232 = vmatprep.subr.mxu0 0.0
    %2233 = vmatpush1.xpose.msra.mxu0 0.0
    %2234 = vmatprep.subr.mxu0 0.0
    %2235 = vmatpush1.xpose.msra.mxu0 0.0
    %2236 = vmatprep.subr.mxu0 0.0
    %2237 = vmatpush1.xpose.msra.mxu0 0.0
    %2238 = vmatprep.subr.mxu0 0.0
    %2239 = vmatpush1.xpose.msra.mxu0 0.0
    %2240 = vmatprep.subr.mxu0 0.0
    %2241 = vmatpush1.xpose.msra.mxu0 0.0
    %2242 = vmatprep.subr.mxu0 0.0
    %2243 = vmatpush1.xpose.msra.mxu0 0.0
    %2244 = vmatprep.subr.mxu0 0.0
    %2245 = vmatpush1.xpose.msra.mxu0 0.0
    %2246 = vmatprep.subr.mxu0 0.0
    %2247 = vmatpush1.xpose.msra.mxu0 0.0
    %2248 = vmatprep.subr.mxu0 0.0
    %2249 = vmatpush1.xpose.msra.mxu0 0.0
    %2250 = vmatprep.subr.mxu0 0.0
    %2251 = vmatpush1.xpose.msra.mxu0 0.0
    %2252 = vmatprep.subr.mxu0 0.0
    %2253 = vmatpush1.xpose.msra.mxu0 0.0
    %2254 = vmatprep.subr.mxu0 0.0
    %2255 = vmatpush1.xpose.msra.mxu0 0.0
    %2256 = vmatprep.subr.mxu0 0.0
    %2257 = vmatpush1.xpose.msra.mxu0 %v508
    %2258 = vmatprep.subr.mxu0 0.0
    %2259 = vmatpush1.xpose.msra.mxu0 %v505
    %2260 = vmatprep.subr.mxu0 0.0
    %2261 = vmatpush1.xpose.msra.mxu0 %v502
    %2262 = vmatprep.subr.mxu0 0.0
    %2263 = vmatpush1.xpose.msra.mxu0 %v499
    %2264 = vmatprep.subr.mxu0 0.0
    %2265 = vmatpush2.xpose.msra.mxu0 0.0
    %2266 = vmatprep.subr.mxu0 0.0
    %2267 = vmatpush2.xpose.msra.mxu0 0.0
    %2268 = vmatprep.subr.mxu0 0.0
    %2269 = vmatpush2.xpose.msra.mxu0 0.0
    %2270 = vmatprep.subr.mxu0 0.0
    %2271 = vmatpush2.xpose.msra.mxu0 0.0
    %2272 = vmatprep.subr.mxu0 0.0
    %2273 = vmatpush2.xpose.msra.mxu0 0.0
    %2274 = vmatprep.subr.mxu0 0.0
    %2275 = vmatpush2.xpose.msra.mxu0 0.0
    %2276 = vmatprep.subr.mxu0 0.0
    %2277 = vmatpush2.xpose.msra.mxu0 0.0
    %2278 = vmatprep.subr.mxu0 0.0
    %2279 = vmatpush2.xpose.msra.mxu0 0.0
    %2280 = vmatprep.subr.mxu0 0.0
    %2281 = vmatpush2.xpose.msra.mxu0 0.0
    %2282 = vmatprep.subr.mxu0 0.0
    %2283 = vmatpush2.xpose.msra.mxu0 0.0
    %2284 = vmatprep.subr.mxu0 0.0
    %2285 = vmatpush2.xpose.msra.mxu0 0.0
    %2286 = vmatprep.subr.mxu0 0.0
    %2287 = vmatpush2.xpose.msra.mxu0 0.0
    %2288 = vmatprep.subr.mxu0 0.0
    %2289 = vmatpush2.xpose.msra.mxu0 0.0
    %2290 = vmatprep.subr.mxu0 0.0
    %2291 = vmatpush2.xpose.msra.mxu0 0.0
    %2292 = vmatprep.subr.mxu0 0.0
    %2293 = vmatpush2.xpose.msra.mxu0 0.0
    %2294 = vmatprep.subr.mxu0 0.0
    %2295 = vmatpush2.xpose.msra.mxu0 0.0
    %2296 = vmatprep.mubr.f32.mxu0 0.0
    %2297 = vmatmul.mubr.f32.gmra.mxu0 %v2160
    %v2298 = vpop.f32.mrf.mxu0
    %v2299 = vadd.f32 %v411, %v2298
    %v2300 = vpop.f32.mrf.mxu0
    %2301 = vdwg.mxu0
    %2302 = vmatprep.subr.mxu0 0.0
    %2303 = vmatpush1.xpose.msra.mxu0 0.0
    %2304 = vmatprep.subr.mxu0 0.0
    %2305 = vmatpush1.xpose.msra.mxu0 0.0
    %2306 = vmatprep.subr.mxu0 0.0
    %2307 = vmatpush1.xpose.msra.mxu0 0.0
    %2308 = vmatprep.subr.mxu0 0.0
    %2309 = vmatpush1.xpose.msra.mxu0 0.0
    %2310 = vmatprep.subr.mxu0 0.0
    %2311 = vmatpush1.xpose.msra.mxu0 0.0
    %2312 = vmatprep.subr.mxu0 0.0
    %2313 = vmatpush1.xpose.msra.mxu0 0.0
    %2314 = vmatprep.subr.mxu0 0.0
    %2315 = vmatpush1.xpose.msra.mxu0 0.0
    %2316 = vmatprep.subr.mxu0 0.0
    %2317 = vmatpush1.xpose.msra.mxu0 0.0
    %2318 = vmatprep.subr.mxu0 0.0
    %2319 = vmatpush1.xpose.msra.mxu0 0.0
    %2320 = vmatprep.subr.mxu0 0.0
    %2321 = vmatpush1.xpose.msra.mxu0 0.0
    %2322 = vmatprep.subr.mxu0 0.0
    %2323 = vmatpush1.xpose.msra.mxu0 0.0
    %2324 = vmatprep.subr.mxu0 0.0
    %2325 = vmatpush1.xpose.msra.mxu0 0.0
    %2326 = vmatprep.subr.mxu0 0.0
    %2327 = vmatpush1.xpose.msra.mxu0 %v590
    %2328 = vmatprep.subr.mxu0 0.0
    %2329 = vmatpush1.xpose.msra.mxu0 %v587
    %2330 = vmatprep.subr.mxu0 0.0
    %2331 = vmatpush1.xpose.msra.mxu0 %v584
    %2332 = vmatprep.subr.mxu0 0.0
    %2333 = vmatpush1.xpose.msra.mxu0 %v581
    %2334 = vmatprep.subr.mxu0 0.0
    %2335 = vmatpush2.xpose.msra.mxu0 0.0
    %2336 = vmatprep.subr.mxu0 0.0
    %2337 = vmatpush2.xpose.msra.mxu0 0.0
    %2338 = vmatprep.subr.mxu0 0.0
    %2339 = vmatpush2.xpose.msra.mxu0 0.0
    %2340 = vmatprep.subr.mxu0 0.0
    %2341 = vmatpush2.xpose.msra.mxu0 0.0
    %2342 = vmatprep.subr.mxu0 0.0
    %2343 = vmatpush2.xpose.msra.mxu0 0.0
    %2344 = vmatprep.subr.mxu0 0.0
    %2345 = vmatpush2.xpose.msra.mxu0 0.0
    %2346 = vmatprep.subr.mxu0 0.0
    %2347 = vmatpush2.xpose.msra.mxu0 0.0
    %2348 = vmatprep.subr.mxu0 0.0
    %2349 = vmatpush2.xpose.msra.mxu0 0.0
    %2350 = vmatprep.subr.mxu0 0.0
    %2351 = vmatpush2.xpose.msra.mxu0 0.0
    %2352 = vmatprep.subr.mxu0 0.0
    %2353 = vmatpush2.xpose.msra.mxu0 0.0
    %2354 = vmatprep.subr.mxu0 0.0
    %2355 = vmatpush2.xpose.msra.mxu0 0.0
    %2356 = vmatprep.subr.mxu0 0.0
    %2357 = vmatpush2.xpose.msra.mxu0 0.0
    %2358 = vmatprep.subr.mxu0 0.0
    %2359 = vmatpush2.xpose.msra.mxu0 0.0
    %2360 = vmatprep.subr.mxu0 0.0
    %2361 = vmatpush2.xpose.msra.mxu0 0.0
    %2362 = vmatprep.subr.mxu0 0.0
    %2363 = vmatpush2.xpose.msra.mxu0 0.0
    %2364 = vmatprep.subr.mxu0 0.0
    %2365 = vmatpush2.xpose.msra.mxu0 0.0
    %2366 = vmatprep.mubr.f32.mxu0 0.0
    %2367 = vmatmul.mubr.f32.gmra.mxu0 %v2160
    %v2368 = vpop.f32.mrf.mxu0
    %v2369 = vadd.f32 %v412, %v2368
    %v2370 = vpop.f32.mrf.mxu0
    %2371 = vdwg.mxu0
    %v2373 = vrot.slane %v2229, 1
    %v2375 = vadd.f32 %v213, %v2373
    %v2376 = vxor.u32 %v2375, 2147483648
    %v2377 = vmul.f32 %v2376, 1.442695
    %v2378 = vpow.pop %v2377
    %v2379 = vadd.f32 %v2378, 1.0
    %v2380 = vrcp.pop %v2379
    %v2381 = vmul.f32 1.0, %v2380
    %v2383 = vrot.slane %v2299, 1
    %v2385 = vadd.f32 %v304, %v2383
    %v2386 = vxor.u32 %v2385, 2147483648
    %v2387 = vmul.f32 %v2386, 1.442695
    %v2388 = vpow.pop %v2387
    %v2389 = vadd.f32 %v2388, 1.0
    %v2390 = vrcp.pop %v2389
    %v2391 = vmul.f32 1.0, %v2390
    %v2393 = vrot.slane %v2369, 1
    %v2395 = vmul.f32 %v2381, %v2393
    %v2396 = vadd.f32 %v395, %v2395
    %v2397 = vtanh.pop %v2396
    %v2398 = vsub.f32 1.0, %v2391
    %v2399 = vmul.f32 %v2398, %v2397
    %v2400 = vrot.slane %v2157, 7
    %v2402 = vmul.f32 %v2391, %v2400
    %v2403 = vadd.f32 %v2399, %v2402
    %vm2404 = vcmask 1040384
    %v2405 = vsel %vm2404, %v682, %v927
    %v2406 = vsel %vm47, %v2405, %v1173
    %vm2407 = vcmask 1042432
    %v2408 = vsel %vm2407, %v2406, %v1419
    %vm2409 = vcmask 1043456
    %v2410 = vsel %vm2409, %v2408, %v1665
    %vm2411 = vcmask 1044480
    %v2412 = vsel %vm2411, %v2410, %v1911
    %vm2413 = vcmask 1045504
    %v2414 = vsel %vm2413, %v2412, %v2157
    %vm2415 = vcmask 1046528
    %v2416 = vsel %vm2415, %v2414, %v2403
    %2417 = vst.msk [vmem:[#allocation2] sm:$0xff] %vm130, %v2416
    %vm2418 = vcmask 261127
    %2419 = vst.msk [vmem:[#allocation4 - $0x7] sm:$0x80] %vm2418, %v2403
    // Predicated region
    $region26: #{tpu_custom_call.1} parent=1 // pred_check
      _
    $region27: #{tpu_custom_call.1} parent=1 // pred_check_branch
      %2421 = sbr.rel (0) target = $region29
    $region28: #{tpu_custom_call.1} parent=1 // pred_region
      %s2423 = ssub.s32 128, 128
      %2424 = vsyncadd [#allocation3], %s2423
      %s2426 = sshll.u32 [#allocation2], 4
      %s2427 = int_to_ptr.vmem [resolvable:$true] %s2426
      %2429 = dma.vmem_to_hbm [thread:$0]  %s2427, 128, %s6, [#allocation3]
    $region29: #{tpu_custom_call.1} parent=1 // pred_fallthru
      _
    // Predicated region
    $region30: #{tpu_custom_call.1} parent=1 // pred_check
      _
    $region31: #{tpu_custom_call.1} parent=1 // pred_check_branch
      %2431 = sbr.rel (0) target = $region33
    $region32: #{tpu_custom_call.1} parent=1 // pred_region
      %s2433 = ssub.s32 16, 16
      %2434 = vsyncadd [#allocation5], %s2433
      %s2436 = sshll.u32 [#allocation4], 4
      %s2437 = int_to_ptr.vmem [resolvable:$true] %s2436
      %2439 = dma.vmem_to_hbm [thread:$0]  %s2437, 16, %s7, [#allocation5]
    $region33: #{tpu_custom_call.1} parent=1 // pred_fallthru
      _
    // Predicated region
    $region34: #{tpu_custom_call.1} parent=1 // pred_check
      _
    $region35: #{tpu_custom_call.1} parent=1 // pred_check_branch
      %2441 = sbr.rel (0) target = $region37
    $region36: #{tpu_custom_call.1} parent=1 // pred_region
      %2442 = dma.done [#allocation3], 128
    $region37: #{tpu_custom_call.1} parent=1 // pred_fallthru
      _
    // Predicated region
    $region38: #{tpu_custom_call.1} parent=1 // pred_check
      _
    $region39: #{tpu_custom_call.1} parent=1 // pred_check_branch
      %2444 = sbr.rel (0) target = $region41
    $region40: #{tpu_custom_call.1} parent=1 // pred_region
      %2445 = dma.done [#allocation5], 16
    $region41: #{tpu_custom_call.1} parent=1 // pred_fallthru
      _
    %2446 = vsyncpa [#allocation3], 1
    %2447 = vsyncpa [#allocation5], 1

</llo_original>
